<compile_context>
chip_gen: v7x
topology: tpu7x:2x2x1
jax: 0.10.0
libtpu: 0.0.40
codegen_flags: <defaults>
</compile_context>

<pallas_src>
import functools

import jax
import jax.numpy as jnp
import numpy as np
from jax.experimental import pallas as pl
from jax.experimental.pallas import tpu as pltpu


def _fused_lstm_kernel(x_ref, wih_ref, whh_ref, b_ref,
                       out_ref, hn_ref, cn_ref,
                       gx_sc, *, seq_len, batch, hidden_dim):
    """One grid step == one LSTM layer over the full sequence."""
    layer = pl.program_id(0)
    S, B, H = seq_len, batch, hidden_dim

    wih = wih_ref[0]          # (DIN_PAD, 4H)  (layer-0 rows beyond D are zero-padded)
    whh = whh_ref[0]          # (H, 4H)
    bias = b_ref[0]           # (1, 4H)

    # ---- Prologue: input projection for ALL timesteps in one MXU matmul. ----
    @pl.when(layer == 0)
    def _():
        gx_sc[...] = (jnp.dot(x_ref[...], wih,
                              preferred_element_type=jnp.float32) + bias)

    @pl.when(layer > 0)
    def _():
        # Previous layer's output is still resident in the constant-index out block.
        gx_sc[...] = (jnp.dot(out_ref[...], wih[:H, :],
                              preferred_element_type=jnp.float32) + bias)

    # ---- Recurrence: only h @ W_hh + element-wise gate math per step. ----
    # Fully unrolled static time loop (equivalent to lax.fori_loop(..., unroll=True)
    # at these sizes, and gives the LLO scheduler full visibility). For long S,
    # switch to lax.fori_loop with partial unroll.
    h = jnp.zeros((B, H), jnp.float32)
    c = jnp.zeros((B, H), jnp.float32)
    for t in range(S):
        row = t * B
        gates = gx_sc[pl.ds(row, B), :] + jnp.dot(
            h, whh, preferred_element_type=jnp.float32)          # (B, 4H)
        i_g = jax.nn.sigmoid(gates[:, 0 * H:1 * H])
        f_g = jax.nn.sigmoid(gates[:, 1 * H:2 * H])
        g_g = jnp.tanh(gates[:, 2 * H:3 * H])
        o_g = jax.nn.sigmoid(gates[:, 3 * H:4 * H])
        c = f_g * c + i_g * g_g
        h = o_g * jnp.tanh(c)
        out_ref[pl.ds(row, B), :] = h.astype(out_ref.dtype)      # VMEM write; HBM once

    hn_ref[0] = h.astype(hn_ref.dtype)
    cn_ref[0] = c.astype(cn_ref.dtype)


def lstm_enc_forward(x2d, wih_all, whh_all, b_all, *, seq_len, batch, hidden_dim):
    """Fused multi-layer LSTM forward pass (h0 = c0 = 0).

    x2d:     (S*B, DIN_PAD) float32, features zero-padded to DIN_PAD = max(D, H)
    wih_all: (L, DIN_PAD, 4H)  transposed W_ih per layer (layer-0 rows beyond D are zero)
    whh_all: (L, H, 4H)        transposed W_hh per layer
    b_all:   (L, 1, 4H)        b_ih + b_hh per layer
    returns (out2d (S*B, H), h_n (L, B, H), c_n (L, B, H))
    """
    L, din_pad, four_h = wih_all.shape
    S, B, H = seq_len, batch, hidden_dim
    assert four_h == 4 * H

    kernel = functools.partial(_fused_lstm_kernel,
                               seq_len=S, batch=B, hidden_dim=H)

    out_shapes = (
        jax.ShapeDtypeStruct((S * B, H), jnp.float32),   # lstm_out (flattened)
        jax.ShapeDtypeStruct((L, B, H), jnp.float32),    # h_n
        jax.ShapeDtypeStruct((L, B, H), jnp.float32),    # c_n
    )

    return pl.pallas_call(
        kernel,
        out_shape=out_shapes,
        grid_spec=pltpu.PrefetchScalarGridSpec(
            num_scalar_prefetch=0,
            grid=(L,),
            in_specs=[
                pl.BlockSpec((S * B, din_pad), lambda l: (0, 0)),        # x (resident)
                pl.BlockSpec((1, din_pad, 4 * H), lambda l: (l, 0, 0)),  # W_ih^T per layer
                pl.BlockSpec((1, H, 4 * H), lambda l: (l, 0, 0)),        # W_hh^T per layer
                pl.BlockSpec((1, 1, 4 * H), lambda l: (l, 0, 0)),        # bias per layer
            ],
            out_specs=[
                pl.BlockSpec((S * B, H), lambda l: (0, 0)),    # lstm_out (resident; also
                                                               # inter-layer activations)
                pl.BlockSpec((1, B, H), lambda l: (l, 0, 0)),  # h_n for this layer
                pl.BlockSpec((1, B, H), lambda l: (l, 0, 0)),  # c_n for this layer
            ],
            scratch_shapes=[
                pltpu.VMEM((S * B, 4 * H), jnp.float32),       # hoisted x @ W_ih + b
            ],
        ),
        compiler_params=pltpu.CompilerParams(
            # Layer axis is a true recurrence (reads previous layer's resident output);
            # never mark it "parallel".
            dimension_semantics=("arbitrary",),
        ),
    )(x2d, wih_all, whh_all, b_all)


class LSTMEncPallas:
    """JAX/Pallas equivalent of the PyTorch LSTM_enc module (forward pass)."""

    def __init__(self, input_dim, hidden_dim, num_layers, batch_size, key):
        self.input_dim = input_dim
        self.hidden_dim = hidden_dim
        self.num_layers = num_layers
        self.batch_size = batch_size
        self.din_pad = max(input_dim, hidden_dim)

        # Deterministic init, matching nn.LSTM param shapes:
        #   weight_ih_l{k}: (4H, D_in_k), weight_hh_l{k}: (4H, H), biases: (4H,)
        # init ~ U(-1/sqrt(H), 1/sqrt(H)) like PyTorch.
        bound = 1.0 / float(np.sqrt(hidden_dim))
        self.params = []
        for layer in range(num_layers):
            d_in = input_dim if layer == 0 else hidden_dim
            key, k1, k2, k3, k4 = jax.random.split(key, 5)
            w_ih = jax.random.uniform(k1, (4 * hidden_dim, d_in),
                                      jnp.float32, -bound, bound)
            w_hh = jax.random.uniform(k2, (4 * hidden_dim, hidden_dim),
                                      jnp.float32, -bound, bound)
            b_ih = jax.random.uniform(k3, (4 * hidden_dim,),
                                      jnp.float32, -bound, bound)
            b_hh = jax.random.uniform(k4, (4 * hidden_dim,),
                                      jnp.float32, -bound, bound)
            self.params.append(
                (w_ih.T, w_hh.T, (b_ih + b_hh).reshape(1, 4 * hidden_dim))
            )

        # Pre-stacked / zero-padded parameters for the fused kernel.
        wih_list = []
        for (w_ih_t, _, _) in self.params:
            pad_rows = self.din_pad - w_ih_t.shape[0]
            wih_list.append(jnp.pad(w_ih_t, ((0, pad_rows), (0, 0))))
        self.wih_all = jnp.stack(wih_list, axis=0)                     # (L, DIN_PAD, 4H)
        self.whh_all = jnp.stack([p[1] for p in self.params], axis=0)  # (L, H, 4H)
        self.b_all = jnp.stack([p[2] for p in self.params], axis=0)    # (L, 1, 4H)

    def __call__(self, x):
        # x: (seq_len, batch, input_dim); h0 = c0 = 0 (module's init_hidden()).
        # TODO(synk): the PyTorch module also re-feeds self.hidden on subsequent calls;
        # only the first-call (zero initial state) semantics are implemented here.
        S, B, D = x.shape
        H = self.hidden_dim
        # Zero-pad features to DIN_PAD and flatten (time, batch) -> rows (done in XLA,
        # so the kernel never reshapes in VMEM and gets a lane/sublane-dense layout).
        x2d = jnp.pad(x, ((0, 0), (0, 0), (0, self.din_pad - D))).reshape(
            S * B, self.din_pad)
        out2d, h_n, c_n = lstm_enc_forward(
            x2d, self.wih_all, self.whh_all, self.b_all,
            seq_len=S, batch=B, hidden_dim=H)
        return out2d.reshape(S, B, H), (h_n, c_n)


def _reference_lstm(x, params, hidden_dim):
    """Pure-JAX reference (lax.scan) to sanity-check the kernel."""
    def one_layer(x_layer, w_ih_t, w_hh_t, bias):
        B = x_layer.shape[1]
        H = hidden_dim

        def step(carry, x_t):
            h, c = carry
            gates = x_t @ w_ih_t + h @ w_hh_t + bias
            i = jax.nn.sigmoid(gates[:, 0 * H:1 * H])
            f = jax.nn.sigmoid(gates[:, 1 * H:2 * H])
            g = jnp.tanh(gates[:, 2 * H:3 * H])
            o = jax.nn.sigmoid(gates[:, 3 * H:4 * H])
            c = f * c + i * g
            h = o * jnp.tanh(c)
            return (h, c), h

        h0 = jnp.zeros((B, H), jnp.float32)
        c0 = jnp.zeros((B, H), jnp.float32)
        (h_n, c_n), out = jax.lax.scan(step, (h0, c0), x_layer)
        return out, h_n, c_n

    layer_in = x
    hs, cs = [], []
    for (w_ih_t, w_hh_t, bias) in params:
        layer_in, h_n, c_n = one_layer(layer_in, w_ih_t, w_hh_t, bias)
        hs.append(h_n)
        cs.append(c_n)
    return layer_in, (jnp.stack(hs, 0), jnp.stack(cs, 0))


if __name__ == "__main__":
    SEQ, BATCH, INPUT_DIM, HIDDEN_DIM, NUM_LAYERS = 8, 2, 8, 32, 2

    key = jax.random.PRNGKey(0)
    key, xkey, pkey = jax.random.split(key, 3)
    x = jax.random.normal(xkey, (SEQ, BATCH, INPUT_DIM), jnp.float32)

    model = LSTMEncPallas(INPUT_DIM, HIDDEN_DIM, NUM_LAYERS, BATCH, pkey)

    lstm_out, (h_n, c_n) = model(x)
    jax.block_until_ready((lstm_out, h_n, c_n))

    # Sanity check against a pure-JAX reference.
    ref_out, (ref_h, ref_c) = _reference_lstm(x, model.params, HIDDEN_DIM)
    np.testing.assert_allclose(np.asarray(lstm_out), np.asarray(ref_out),
                               rtol=1e-5, atol=1e-5)
    np.testing.assert_allclose(np.asarray(h_n), np.asarray(ref_h),
                               rtol=1e-5, atol=1e-5)
    np.testing.assert_allclose(np.asarray(c_n), np.asarray(ref_c),
                               rtol=1e-5, atol=1e-5)

    assert lstm_out.shape == (SEQ, BATCH, HIDDEN_DIM)
    assert h_n.shape == (NUM_LAYERS, BATCH, HIDDEN_DIM)
    assert c_n.shape == (NUM_LAYERS, BATCH, HIDDEN_DIM)

    print("KERNEL_OK")
</pallas_src>

<mosaic_0001>
module attributes {stable_mosaic.version = 11 : i64} {
  func.func @_fused_lstm_kernel(%arg0: i32, %arg1: memref<16x32xf32, #tpu.memory_space<vmem>>, %arg2: memref<1x32x128xf32, #tpu.memory_space<vmem>>, %arg3: memref<1x32x128xf32, #tpu.memory_space<vmem>>, %arg4: memref<1x1x128xf32, #tpu.memory_space<vmem>>, %arg5: memref<16x32xf32, #tpu.memory_space<vmem>>, %arg6: memref<1x2x32xf32, #tpu.memory_space<vmem>>, %arg7: memref<1x2x32xf32, #tpu.memory_space<vmem>>, %arg8: memref<16x128xf32, #tpu.memory_space<vmem>>) attributes {dimension_semantics = [#tpu.dimension_semantics<arbitrary>], iteration_bounds = array<i64: 2>, scalar_prefetch = 0 : i64, scratch_operands = 1 : i64, tpu.core_type = #tpu.core_type<tc>, window_params = [{pipeline_mode = #tpu.pipeline_mode<synchronous>, transform_indices = @transform_0, window_bounds = array<i64: 16, 32>}, {transform_indices = @transform_1, window_bounds = array<i64: 1, 32, 128>}, {transform_indices = @transform_2, window_bounds = array<i64: 1, 32, 128>}, {transform_indices = @transform_3, window_bounds = array<i64: 1, 1, 128>}, {pipeline_mode = #tpu.pipeline_mode<synchronous>, transform_indices = @transform_4, window_bounds = array<i64: 16, 32>}, {transform_indices = @transform_5, window_bounds = array<i64: 1, 2, 32>}, {transform_indices = @transform_6, window_bounds = array<i64: 1, 2, 32>}]} {
    %c0 = arith.constant 0 : index
    %c0_0 = arith.constant 0 : index
    %c0_1 = arith.constant 0 : index
    %0 = vector.load %arg2[%c0, %c0_0, %c0_1] : memref<1x32x128xf32, #tpu.memory_space<vmem>>, vector<1x32x128xf32>
    %1 = vector.shape_cast %0 : vector<1x32x128xf32> to vector<32x128xf32>
    %c0_2 = arith.constant 0 : index
    %c0_3 = arith.constant 0 : index
    %c0_4 = arith.constant 0 : index
    %2 = vector.load %arg3[%c0_2, %c0_3, %c0_4] : memref<1x32x128xf32, #tpu.memory_space<vmem>>, vector<1x32x128xf32>
    %3 = vector.shape_cast %2 : vector<1x32x128xf32> to vector<32x128xf32>
    %c0_5 = arith.constant 0 : index
    %c0_6 = arith.constant 0 : index
    %c0_7 = arith.constant 0 : index
    %4 = vector.load %arg4[%c0_5, %c0_6, %c0_7] : memref<1x1x128xf32, #tpu.memory_space<vmem>>, vector<1x1x128xf32>
    %5 = vector.shape_cast %4 : vector<1x1x128xf32> to vector<1x128xf32>
    %c0_i32 = arith.constant 0 : i32
    %6 = arith.cmpi eq, %arg0, %c0_i32 : i32
    %7 = arith.extui %6 : i1 to i32
    %c0_i32_8 = arith.constant 0 : i32
    %8 = arith.cmpi ne, %7, %c0_i32_8 : i32
    scf.if %8 {
      %c0_75 = arith.constant 0 : index
      %c0_76 = arith.constant 0 : index
      %252 = vector.load %arg1[%c0_75, %c0_76] : memref<16x32xf32, #tpu.memory_space<vmem>>, vector<16x32xf32>
      %cst_77 = arith.constant dense<0.000000e+00> : vector<16x128xf32>
      %253 = tpu.matmul %252, %1, %cst_77 {dimension_numbers = #tpu.dot_dimension_numbers<[1], [0], [0], [1], [0, 0, 1, 1], [], []>} : vector<16x32xf32>, vector<32x128xf32>, vector<16x128xf32> -> vector<16x128xf32>
      %254 = vector.broadcast %5 : vector<1x128xf32> to vector<16x128xf32>
      %255 = arith.addf %253, %254 : vector<16x128xf32>
      %c0_78 = arith.constant 0 : index
      %c0_79 = arith.constant 0 : index
      %256 = vector.load %arg8[%c0_78, %c0_79] : memref<16x128xf32, #tpu.memory_space<vmem>>, vector<16x128xf32>
      tpu.vector_store %arg8[%c0_78, %c0_79], %255 {strides = array<i32>} : memref<16x128xf32, #tpu.memory_space<vmem>>, vector<16x128xf32>,
    } else {
    }
    %c0_i32_9 = arith.constant 0 : i32
    %9 = arith.cmpi sgt, %arg0, %c0_i32_9 : i32
    %10 = arith.extui %9 : i1 to i32
    %c0_i32_10 = arith.constant 0 : i32
    %11 = arith.cmpi ne, %10, %c0_i32_10 : i32
    scf.if %11 {
      %c0_75 = arith.constant 0 : index
      %c0_76 = arith.constant 0 : index
      %252 = vector.load %arg5[%c0_75, %c0_76] : memref<16x32xf32, #tpu.memory_space<vmem>>, vector<16x32xf32>
      %cst_77 = arith.constant dense<0.000000e+00> : vector<16x128xf32>
      %253 = tpu.matmul %252, %1, %cst_77 {dimension_numbers = #tpu.dot_dimension_numbers<[1], [0], [0], [1], [0, 0, 1, 1], [], []>} : vector<16x32xf32>, vector<32x128xf32>, vector<16x128xf32> -> vector<16x128xf32>
      %254 = vector.broadcast %5 : vector<1x128xf32> to vector<16x128xf32>
      %255 = arith.addf %253, %254 : vector<16x128xf32>
      %c0_78 = arith.constant 0 : index
      %c0_79 = arith.constant 0 : index
      %256 = vector.load %arg8[%c0_78, %c0_79] : memref<16x128xf32, #tpu.memory_space<vmem>>, vector<16x128xf32>
      tpu.vector_store %arg8[%c0_78, %c0_79], %255 {strides = array<i32>} : memref<16x128xf32, #tpu.memory_space<vmem>>, vector<16x128xf32>,
    } else {
    }
    %cst = arith.constant 0.000000e+00 : f32
    %12 = vector.broadcast %cst : f32 to vector<2x32xf32>
    %cst_11 = arith.constant 0.000000e+00 : f32
    %13 = vector.broadcast %cst_11 : f32 to vector<2x32xf32>
    %c0_12 = arith.constant 0 : index
    %c0_13 = arith.constant 0 : index
    %14 = vector.load %arg8[%c0_12, %c0_13] : memref<16x128xf32, #tpu.memory_space<vmem>>, vector<2x128xf32>
    %cst_14 = arith.constant dense<0.000000e+00> : vector<2x128xf32>
    %15 = tpu.matmul %12, %3, %cst_14 {dimension_numbers = #tpu.dot_dimension_numbers<[1], [0], [0], [1], [0, 0, 1, 1], [], []>} : vector<2x32xf32>, vector<32x128xf32>, vector<2x128xf32> -> vector<2x128xf32>
    %16 = arith.addf %14, %15 : vector<2x128xf32>
    %17 = vector.extract_strided_slice %16 {offsets = [0, 0], sizes = [2, 32], strides = [1, 1]} : vector<2x128xf32> to vector<2x32xf32>
    %18 = arith.negf %17 : vector<2x32xf32>
    %19 = math.exp %18 : vector<2x32xf32>
    %cst_15 = arith.constant 1.000000e+00 : f32
    %20 = vector.broadcast %cst_15 : f32 to vector<2x32xf32>
    %21 = arith.addf %20, %19 : vector<2x32xf32>
    %22 = arith.divf %20, %21 : vector<2x32xf32>
    %23 = vector.extract_strided_slice %16 {offsets = [0, 32], sizes = [2, 32], strides = [1, 1]} : vector<2x128xf32> to vector<2x32xf32>
    %24 = arith.negf %23 : vector<2x32xf32>
    %25 = math.exp %24 : vector<2x32xf32>
    %cst_16 = arith.constant 1.000000e+00 : f32
    %26 = vector.broadcast %cst_16 : f32 to vector<2x32xf32>
    %27 = arith.addf %26, %25 : vector<2x32xf32>
    %28 = arith.divf %26, %27 : vector<2x32xf32>
    %29 = vector.extract_strided_slice %16 {offsets = [0, 64], sizes = [2, 32], strides = [1, 1]} : vector<2x128xf32> to vector<2x32xf32>
    %30 = math.tanh %29 : vector<2x32xf32>
    %31 = vector.extract_strided_slice %16 {offsets = [0, 96], sizes = [2, 32], strides = [1, 1]} : vector<2x128xf32> to vector<2x32xf32>
    %32 = arith.negf %31 : vector<2x32xf32>
    %33 = math.exp %32 : vector<2x32xf32>
    %cst_17 = arith.constant 1.000000e+00 : f32
    %34 = vector.broadcast %cst_17 : f32 to vector<2x32xf32>
    %35 = arith.addf %34, %33 : vector<2x32xf32>
    %36 = arith.divf %34, %35 : vector<2x32xf32>
    %37 = arith.mulf %28, %13 : vector<2x32xf32>
    %38 = arith.mulf %22, %30 : vector<2x32xf32>
    %39 = arith.addf %37, %38 : vector<2x32xf32>
    %40 = math.tanh %39 : vector<2x32xf32>
    %41 = arith.mulf %36, %40 : vector<2x32xf32>
    %c0_18 = arith.constant 0 : index
    %c0_19 = arith.constant 0 : index
    %42 = vector.load %arg5[%c0_18, %c0_19] : memref<16x32xf32, #tpu.memory_space<vmem>>, vector<2x32xf32>
    tpu.vector_store %arg5[%c0_18, %c0_19], %41 {strides = array<i32>} : memref<16x32xf32, #tpu.memory_space<vmem>>, vector<2x32xf32>,
    %c2 = arith.constant 2 : index
    %c0_20 = arith.constant 0 : index
    %43 = vector.load %arg8[%c2, %c0_20] : memref<16x128xf32, #tpu.memory_space<vmem>>, vector<2x128xf32>
    %cst_21 = arith.constant dense<0.000000e+00> : vector<2x128xf32>
    %44 = tpu.matmul %41, %3, %cst_21 {dimension_numbers = #tpu.dot_dimension_numbers<[1], [0], [0], [1], [0, 0, 1, 1], [], []>} : vector<2x32xf32>, vector<32x128xf32>, vector<2x128xf32> -> vector<2x128xf32>
    %45 = arith.addf %43, %44 : vector<2x128xf32>
    %46 = vector.extract_strided_slice %45 {offsets = [0, 0], sizes = [2, 32], strides = [1, 1]} : vector<2x128xf32> to vector<2x32xf32>
    %47 = arith.negf %46 : vector<2x32xf32>
    %48 = math.exp %47 : vector<2x32xf32>
    %cst_22 = arith.constant 1.000000e+00 : f32
    %49 = vector.broadcast %cst_22 : f32 to vector<2x32xf32>
    %50 = arith.addf %49, %48 : vector<2x32xf32>
    %51 = arith.divf %49, %50 : vector<2x32xf32>
    %52 = vector.extract_strided_slice %45 {offsets = [0, 32], sizes = [2, 32], strides = [1, 1]} : vector<2x128xf32> to vector<2x32xf32>
    %53 = arith.negf %52 : vector<2x32xf32>
    %54 = math.exp %53 : vector<2x32xf32>
    %cst_23 = arith.constant 1.000000e+00 : f32
    %55 = vector.broadcast %cst_23 : f32 to vector<2x32xf32>
    %56 = arith.addf %55, %54 : vector<2x32xf32>
    %57 = arith.divf %55, %56 : vector<2x32xf32>
    %58 = vector.extract_strided_slice %45 {offsets = [0, 64], sizes = [2, 32], strides = [1, 1]} : vector<2x128xf32> to vector<2x32xf32>
    %59 = math.tanh %58 : vector<2x32xf32>
    %60 = vector.extract_strided_slice %45 {offsets = [0, 96], sizes = [2, 32], strides = [1, 1]} : vector<2x128xf32> to vector<2x32xf32>
    %61 = arith.negf %60 : vector<2x32xf32>
    %62 = math.exp %61 : vector<2x32xf32>
    %cst_24 = arith.constant 1.000000e+00 : f32
    %63 = vector.broadcast %cst_24 : f32 to vector<2x32xf32>
    %64 = arith.addf %63, %62 : vector<2x32xf32>
    %65 = arith.divf %63, %64 : vector<2x32xf32>
    %66 = arith.mulf %57, %39 : vector<2x32xf32>
    %67 = arith.mulf %51, %59 : vector<2x32xf32>
    %68 = arith.addf %66, %67 : vector<2x32xf32>
    %69 = math.tanh %68 : vector<2x32xf32>
    %70 = arith.mulf %65, %69 : vector<2x32xf32>
    %c2_25 = arith.constant 2 : index
    %c0_26 = arith.constant 0 : index
    %71 = vector.load %arg5[%c2_25, %c0_26] : memref<16x32xf32, #tpu.memory_space<vmem>>, vector<2x32xf32>
    tpu.vector_store %arg5[%c2_25, %c0_26], %70 {strides = array<i32>} : memref<16x32xf32, #tpu.memory_space<vmem>>, vector<2x32xf32>,
    %c4 = arith.constant 4 : index
    %c0_27 = arith.constant 0 : index
    %72 = vector.load %arg8[%c4, %c0_27] : memref<16x128xf32, #tpu.memory_space<vmem>>, vector<2x128xf32>
    %cst_28 = arith.constant dense<0.000000e+00> : vector<2x128xf32>
    %73 = tpu.matmul %70, %3, %cst_28 {dimension_numbers = #tpu.dot_dimension_numbers<[1], [0], [0], [1], [0, 0, 1, 1], [], []>} : vector<2x32xf32>, vector<32x128xf32>, vector<2x128xf32> -> vector<2x128xf32>
    %74 = arith.addf %72, %73 : vector<2x128xf32>
    %75 = vector.extract_strided_slice %74 {offsets = [0, 0], sizes = [2, 32], strides = [1, 1]} : vector<2x128xf32> to vector<2x32xf32>
    %76 = arith.negf %75 : vector<2x32xf32>
    %77 = math.exp %76 : vector<2x32xf32>
    %cst_29 = arith.constant 1.000000e+00 : f32
    %78 = vector.broadcast %cst_29 : f32 to vector<2x32xf32>
    %79 = arith.addf %78, %77 : vector<2x32xf32>
    %80 = arith.divf %78, %79 : vector<2x32xf32>
    %81 = vector.extract_strided_slice %74 {offsets = [0, 32], sizes = [2, 32], strides = [1, 1]} : vector<2x128xf32> to vector<2x32xf32>
    %82 = arith.negf %81 : vector<2x32xf32>
    %83 = math.exp %82 : vector<2x32xf32>
    %cst_30 = arith.constant 1.000000e+00 : f32
    %84 = vector.broadcast %cst_30 : f32 to vector<2x32xf32>
    %85 = arith.addf %84, %83 : vector<2x32xf32>
    %86 = arith.divf %84, %85 : vector<2x32xf32>
    %87 = vector.extract_strided_slice %74 {offsets = [0, 64], sizes = [2, 32], strides = [1, 1]} : vector<2x128xf32> to vector<2x32xf32>
    %88 = math.tanh %87 : vector<2x32xf32>
    %89 = vector.extract_strided_slice %74 {offsets = [0, 96], sizes = [2, 32], strides = [1, 1]} : vector<2x128xf32> to vector<2x32xf32>
    %90 = arith.negf %89 : vector<2x32xf32>
    %91 = math.exp %90 : vector<2x32xf32>
    %cst_31 = arith.constant 1.000000e+00 : f32
    %92 = vector.broadcast %cst_31 : f32 to vector<2x32xf32>
    %93 = arith.addf %92, %91 : vector<2x32xf32>
    %94 = arith.divf %92, %93 : vector<2x32xf32>
    %95 = arith.mulf %86, %68 : vector<2x32xf32>
    %96 = arith.mulf %80, %88 : vector<2x32xf32>
    %97 = arith.addf %95, %96 : vector<2x32xf32>
    %98 = math.tanh %97 : vector<2x32xf32>
    %99 = arith.mulf %94, %98 : vector<2x32xf32>
    %c4_32 = arith.constant 4 : index
    %c0_33 = arith.constant 0 : index
    %100 = vector.load %arg5[%c4_32, %c0_33] : memref<16x32xf32, #tpu.memory_space<vmem>>, vector<2x32xf32>
    tpu.vector_store %arg5[%c4_32, %c0_33], %99 {strides = array<i32>} : memref<16x32xf32, #tpu.memory_space<vmem>>, vector<2x32xf32>,
    %c6 = arith.constant 6 : index
    %c0_34 = arith.constant 0 : index
    %101 = vector.load %arg8[%c6, %c0_34] : memref<16x128xf32, #tpu.memory_space<vmem>>, vector<2x128xf32>
    %cst_35 = arith.constant dense<0.000000e+00> : vector<2x128xf32>
    %102 = tpu.matmul %99, %3, %cst_35 {dimension_numbers = #tpu.dot_dimension_numbers<[1], [0], [0], [1], [0, 0, 1, 1], [], []>} : vector<2x32xf32>, vector<32x128xf32>, vector<2x128xf32> -> vector<2x128xf32>
    %103 = arith.addf %101, %102 : vector<2x128xf32>
    %104 = vector.extract_strided_slice %103 {offsets = [0, 0], sizes = [2, 32], strides = [1, 1]} : vector<2x128xf32> to vector<2x32xf32>
    %105 = arith.negf %104 : vector<2x32xf32>
    %106 = math.exp %105 : vector<2x32xf32>
    %cst_36 = arith.constant 1.000000e+00 : f32
    %107 = vector.broadcast %cst_36 : f32 to vector<2x32xf32>
    %108 = arith.addf %107, %106 : vector<2x32xf32>
    %109 = arith.divf %107, %108 : vector<2x32xf32>
    %110 = vector.extract_strided_slice %103 {offsets = [0, 32], sizes = [2, 32], strides = [1, 1]} : vector<2x128xf32> to vector<2x32xf32>
    %111 = arith.negf %110 : vector<2x32xf32>
    %112 = math.exp %111 : vector<2x32xf32>
    %cst_37 = arith.constant 1.000000e+00 : f32
    %113 = vector.broadcast %cst_37 : f32 to vector<2x32xf32>
    %114 = arith.addf %113, %112 : vector<2x32xf32>
    %115 = arith.divf %113, %114 : vector<2x32xf32>
    %116 = vector.extract_strided_slice %103 {offsets = [0, 64], sizes = [2, 32], strides = [1, 1]} : vector<2x128xf32> to vector<2x32xf32>
    %117 = math.tanh %116 : vector<2x32xf32>
    %118 = vector.extract_strided_slice %103 {offsets = [0, 96], sizes = [2, 32], strides = [1, 1]} : vector<2x128xf32> to vector<2x32xf32>
    %119 = arith.negf %118 : vector<2x32xf32>
    %120 = math.exp %119 : vector<2x32xf32>
    %cst_38 = arith.constant 1.000000e+00 : f32
    %121 = vector.broadcast %cst_38 : f32 to vector<2x32xf32>
    %122 = arith.addf %121, %120 : vector<2x32xf32>
    %123 = arith.divf %121, %122 : vector<2x32xf32>
    %124 = arith.mulf %115, %97 : vector<2x32xf32>
    %125 = arith.mulf %109, %117 : vector<2x32xf32>
    %126 = arith.addf %124, %125 : vector<2x32xf32>
    %127 = math.tanh %126 : vector<2x32xf32>
    %128 = arith.mulf %123, %127 : vector<2x32xf32>
    %c6_39 = arith.constant 6 : index
    %c0_40 = arith.constant 0 : index
    %129 = vector.load %arg5[%c6_39, %c0_40] : memref<16x32xf32, #tpu.memory_space<vmem>>, vector<2x32xf32>
    tpu.vector_store %arg5[%c6_39, %c0_40], %128 {strides = array<i32>} : memref<16x32xf32, #tpu.memory_space<vmem>>, vector<2x32xf32>,
    %c8 = arith.constant 8 : index
    %c0_41 = arith.constant 0 : index
    %130 = vector.load %arg8[%c8, %c0_41] : memref<16x128xf32, #tpu.memory_space<vmem>>, vector<2x128xf32>
    %cst_42 = arith.constant dense<0.000000e+00> : vector<2x128xf32>
    %131 = tpu.matmul %128, %3, %cst_42 {dimension_numbers = #tpu.dot_dimension_numbers<[1], [0], [0], [1], [0, 0, 1, 1], [], []>} : vector<2x32xf32>, vector<32x128xf32>, vector<2x128xf32> -> vector<2x128xf32>
    %132 = arith.addf %130, %131 : vector<2x128xf32>
    %133 = vector.extract_strided_slice %132 {offsets = [0, 0], sizes = [2, 32], strides = [1, 1]} : vector<2x128xf32> to vector<2x32xf32>
    %134 = arith.negf %133 : vector<2x32xf32>
    %135 = math.exp %134 : vector<2x32xf32>
    %cst_43 = arith.constant 1.000000e+00 : f32
    %136 = vector.broadcast %cst_43 : f32 to vector<2x32xf32>
    %137 = arith.addf %136, %135 : vector<2x32xf32>
    %138 = arith.divf %136, %137 : vector<2x32xf32>
    %139 = vector.extract_strided_slice %132 {offsets = [0, 32], sizes = [2, 32], strides = [1, 1]} : vector<2x128xf32> to vector<2x32xf32>
    %140 = arith.negf %139 : vector<2x32xf32>
    %141 = math.exp %140 : vector<2x32xf32>
    %cst_44 = arith.constant 1.000000e+00 : f32
    %142 = vector.broadcast %cst_44 : f32 to vector<2x32xf32>
    %143 = arith.addf %142, %141 : vector<2x32xf32>
    %144 = arith.divf %142, %143 : vector<2x32xf32>
    %145 = vector.extract_strided_slice %132 {offsets = [0, 64], sizes = [2, 32], strides = [1, 1]} : vector<2x128xf32> to vector<2x32xf32>
    %146 = math.tanh %145 : vector<2x32xf32>
    %147 = vector.extract_strided_slice %132 {offsets = [0, 96], sizes = [2, 32], strides = [1, 1]} : vector<2x128xf32> to vector<2x32xf32>
    %148 = arith.negf %147 : vector<2x32xf32>
    %149 = math.exp %148 : vector<2x32xf32>
    %cst_45 = arith.constant 1.000000e+00 : f32
    %150 = vector.broadcast %cst_45 : f32 to vector<2x32xf32>
    %151 = arith.addf %150, %149 : vector<2x32xf32>
    %152 = arith.divf %150, %151 : vector<2x32xf32>
    %153 = arith.mulf %144, %126 : vector<2x32xf32>
    %154 = arith.mulf %138, %146 : vector<2x32xf32>
    %155 = arith.addf %153, %154 : vector<2x32xf32>
    %156 = math.tanh %155 : vector<2x32xf32>
    %157 = arith.mulf %152, %156 : vector<2x32xf32>
    %c8_46 = arith.constant 8 : index
    %c0_47 = arith.constant 0 : index
    %158 = vector.load %arg5[%c8_46, %c0_47] : memref<16x32xf32, #tpu.memory_space<vmem>>, vector<2x32xf32>
    tpu.vector_store %arg5[%c8_46, %c0_47], %157 {strides = array<i32>} : memref<16x32xf32, #tpu.memory_space<vmem>>, vector<2x32xf32>,
    %c10 = arith.constant 10 : index
    %c0_48 = arith.constant 0 : index
    %159 = vector.load %arg8[%c10, %c0_48] : memref<16x128xf32, #tpu.memory_space<vmem>>, vector<2x128xf32>
    %cst_49 = arith.constant dense<0.000000e+00> : vector<2x128xf32>
    %160 = tpu.matmul %157, %3, %cst_49 {dimension_numbers = #tpu.dot_dimension_numbers<[1], [0], [0], [1], [0, 0, 1, 1], [], []>} : vector<2x32xf32>, vector<32x128xf32>, vector<2x128xf32> -> vector<2x128xf32>
    %161 = arith.addf %159, %160 : vector<2x128xf32>
    %162 = vector.extract_strided_slice %161 {offsets = [0, 0], sizes = [2, 32], strides = [1, 1]} : vector<2x128xf32> to vector<2x32xf32>
    %163 = arith.negf %162 : vector<2x32xf32>
    %164 = math.exp %163 : vector<2x32xf32>
    %cst_50 = arith.constant 1.000000e+00 : f32
    %165 = vector.broadcast %cst_50 : f32 to vector<2x32xf32>
    %166 = arith.addf %165, %164 : vector<2x32xf32>
    %167 = arith.divf %165, %166 : vector<2x32xf32>
    %168 = vector.extract_strided_slice %161 {offsets = [0, 32], sizes = [2, 32], strides = [1, 1]} : vector<2x128xf32> to vector<2x32xf32>
    %169 = arith.negf %168 : vector<2x32xf32>
    %170 = math.exp %169 : vector<2x32xf32>
    %cst_51 = arith.constant 1.000000e+00 : f32
    %171 = vector.broadcast %cst_51 : f32 to vector<2x32xf32>
    %172 = arith.addf %171, %170 : vector<2x32xf32>
    %173 = arith.divf %171, %172 : vector<2x32xf32>
    %174 = vector.extract_strided_slice %161 {offsets = [0, 64], sizes = [2, 32], strides = [1, 1]} : vector<2x128xf32> to vector<2x32xf32>
    %175 = math.tanh %174 : vector<2x32xf32>
    %176 = vector.extract_strided_slice %161 {offsets = [0, 96], sizes = [2, 32], strides = [1, 1]} : vector<2x128xf32> to vector<2x32xf32>
    %177 = arith.negf %176 : vector<2x32xf32>
    %178 = math.exp %177 : vector<2x32xf32>
    %cst_52 = arith.constant 1.000000e+00 : f32
    %179 = vector.broadcast %cst_52 : f32 to vector<2x32xf32>
    %180 = arith.addf %179, %178 : vector<2x32xf32>
    %181 = arith.divf %179, %180 : vector<2x32xf32>
    %182 = arith.mulf %173, %155 : vector<2x32xf32>
    %183 = arith.mulf %167, %175 : vector<2x32xf32>
    %184 = arith.addf %182, %183 : vector<2x32xf32>
    %185 = math.tanh %184 : vector<2x32xf32>
    %186 = arith.mulf %181, %185 : vector<2x32xf32>
    %c10_53 = arith.constant 10 : index
    %c0_54 = arith.constant 0 : index
    %187 = vector.load %arg5[%c10_53, %c0_54] : memref<16x32xf32, #tpu.memory_space<vmem>>, vector<2x32xf32>
    tpu.vector_store %arg5[%c10_53, %c0_54], %186 {strides = array<i32>} : memref<16x32xf32, #tpu.memory_space<vmem>>, vector<2x32xf32>,
    %c12 = arith.constant 12 : index
    %c0_55 = arith.constant 0 : index
    %188 = vector.load %arg8[%c12, %c0_55] : memref<16x128xf32, #tpu.memory_space<vmem>>, vector<2x128xf32>
    %cst_56 = arith.constant dense<0.000000e+00> : vector<2x128xf32>
    %189 = tpu.matmul %186, %3, %cst_56 {dimension_numbers = #tpu.dot_dimension_numbers<[1], [0], [0], [1], [0, 0, 1, 1], [], []>} : vector<2x32xf32>, vector<32x128xf32>, vector<2x128xf32> -> vector<2x128xf32>
    %190 = arith.addf %188, %189 : vector<2x128xf32>
    %191 = vector.extract_strided_slice %190 {offsets = [0, 0], sizes = [2, 32], strides = [1, 1]} : vector<2x128xf32> to vector<2x32xf32>
    %192 = arith.negf %191 : vector<2x32xf32>
    %193 = math.exp %192 : vector<2x32xf32>
    %cst_57 = arith.constant 1.000000e+00 : f32
    %194 = vector.broadcast %cst_57 : f32 to vector<2x32xf32>
    %195 = arith.addf %194, %193 : vector<2x32xf32>
    %196 = arith.divf %194, %195 : vector<2x32xf32>
    %197 = vector.extract_strided_slice %190 {offsets = [0, 32], sizes = [2, 32], strides = [1, 1]} : vector<2x128xf32> to vector<2x32xf32>
    %198 = arith.negf %197 : vector<2x32xf32>
    %199 = math.exp %198 : vector<2x32xf32>
    %cst_58 = arith.constant 1.000000e+00 : f32
    %200 = vector.broadcast %cst_58 : f32 to vector<2x32xf32>
    %201 = arith.addf %200, %199 : vector<2x32xf32>
    %202 = arith.divf %200, %201 : vector<2x32xf32>
    %203 = vector.extract_strided_slice %190 {offsets = [0, 64], sizes = [2, 32], strides = [1, 1]} : vector<2x128xf32> to vector<2x32xf32>
    %204 = math.tanh %203 : vector<2x32xf32>
    %205 = vector.extract_strided_slice %190 {offsets = [0, 96], sizes = [2, 32], strides = [1, 1]} : vector<2x128xf32> to vector<2x32xf32>
    %206 = arith.negf %205 : vector<2x32xf32>
    %207 = math.exp %206 : vector<2x32xf32>
    %cst_59 = arith.constant 1.000000e+00 : f32
    %208 = vector.broadcast %cst_59 : f32 to vector<2x32xf32>
    %209 = arith.addf %208, %207 : vector<2x32xf32>
    %210 = arith.divf %208, %209 : vector<2x32xf32>
    %211 = arith.mulf %202, %184 : vector<2x32xf32>
    %212 = arith.mulf %196, %204 : vector<2x32xf32>
    %213 = arith.addf %211, %212 : vector<2x32xf32>
    %214 = math.tanh %213 : vector<2x32xf32>
    %215 = arith.mulf %210, %214 : vector<2x32xf32>
    %c12_60 = arith.constant 12 : index
    %c0_61 = arith.constant 0 : index
    %216 = vector.load %arg5[%c12_60, %c0_61] : memref<16x32xf32, #tpu.memory_space<vmem>>, vector<2x32xf32>
    tpu.vector_store %arg5[%c12_60, %c0_61], %215 {strides = array<i32>} : memref<16x32xf32, #tpu.memory_space<vmem>>, vector<2x32xf32>,
    %c14 = arith.constant 14 : index
    %c0_62 = arith.constant 0 : index
    %217 = vector.load %arg8[%c14, %c0_62] : memref<16x128xf32, #tpu.memory_space<vmem>>, vector<2x128xf32>
    %cst_63 = arith.constant dense<0.000000e+00> : vector<2x128xf32>
    %218 = tpu.matmul %215, %3, %cst_63 {dimension_numbers = #tpu.dot_dimension_numbers<[1], [0], [0], [1], [0, 0, 1, 1], [], []>} : vector<2x32xf32>, vector<32x128xf32>, vector<2x128xf32> -> vector<2x128xf32>
    %219 = arith.addf %217, %218 : vector<2x128xf32>
    %220 = vector.extract_strided_slice %219 {offsets = [0, 0], sizes = [2, 32], strides = [1, 1]} : vector<2x128xf32> to vector<2x32xf32>
    %221 = arith.negf %220 : vector<2x32xf32>
    %222 = math.exp %221 : vector<2x32xf32>
    %cst_64 = arith.constant 1.000000e+00 : f32
    %223 = vector.broadcast %cst_64 : f32 to vector<2x32xf32>
    %224 = arith.addf %223, %222 : vector<2x32xf32>
    %225 = arith.divf %223, %224 : vector<2x32xf32>
    %226 = vector.extract_strided_slice %219 {offsets = [0, 32], sizes = [2, 32], strides = [1, 1]} : vector<2x128xf32> to vector<2x32xf32>
    %227 = arith.negf %226 : vector<2x32xf32>
    %228 = math.exp %227 : vector<2x32xf32>
    %cst_65 = arith.constant 1.000000e+00 : f32
    %229 = vector.broadcast %cst_65 : f32 to vector<2x32xf32>
    %230 = arith.addf %229, %228 : vector<2x32xf32>
    %231 = arith.divf %229, %230 : vector<2x32xf32>
    %232 = vector.extract_strided_slice %219 {offsets = [0, 64], sizes = [2, 32], strides = [1, 1]} : vector<2x128xf32> to vector<2x32xf32>
    %233 = math.tanh %232 : vector<2x32xf32>
    %234 = vector.extract_strided_slice %219 {offsets = [0, 96], sizes = [2, 32], strides = [1, 1]} : vector<2x128xf32> to vector<2x32xf32>
    %235 = arith.negf %234 : vector<2x32xf32>
    %236 = math.exp %235 : vector<2x32xf32>
    %cst_66 = arith.constant 1.000000e+00 : f32
    %237 = vector.broadcast %cst_66 : f32 to vector<2x32xf32>
    %238 = arith.addf %237, %236 : vector<2x32xf32>
    %239 = arith.divf %237, %238 : vector<2x32xf32>
    %240 = arith.mulf %231, %213 : vector<2x32xf32>
    %241 = arith.mulf %225, %233 : vector<2x32xf32>
    %242 = arith.addf %240, %241 : vector<2x32xf32>
    %243 = math.tanh %242 : vector<2x32xf32>
    %244 = arith.mulf %239, %243 : vector<2x32xf32>
    %c14_67 = arith.constant 14 : index
    %c0_68 = arith.constant 0 : index
    %245 = vector.load %arg5[%c14_67, %c0_68] : memref<16x32xf32, #tpu.memory_space<vmem>>, vector<2x32xf32>
    tpu.vector_store %arg5[%c14_67, %c0_68], %244 {strides = array<i32>} : memref<16x32xf32, #tpu.memory_space<vmem>>, vector<2x32xf32>,
    %c0_69 = arith.constant 0 : index
    %c0_70 = arith.constant 0 : index
    %c0_71 = arith.constant 0 : index
    %246 = vector.load %arg6[%c0_69, %c0_70, %c0_71] : memref<1x2x32xf32, #tpu.memory_space<vmem>>, vector<1x2x32xf32>
    %247 = vector.shape_cast %246 : vector<1x2x32xf32> to vector<2x32xf32>
    %248 = vector.shape_cast %244 : vector<2x32xf32> to vector<1x2x32xf32>
    tpu.vector_store %arg6[%c0_69, %c0_70, %c0_71], %248 {strides = array<i32>} : memref<1x2x32xf32, #tpu.memory_space<vmem>>, vector<1x2x32xf32>,
    %c0_72 = arith.constant 0 : index
    %c0_73 = arith.constant 0 : index
    %c0_74 = arith.constant 0 : index
    %249 = vector.load %arg7[%c0_72, %c0_73, %c0_74] : memref<1x2x32xf32, #tpu.memory_space<vmem>>, vector<1x2x32xf32>
    %250 = vector.shape_cast %249 : vector<1x2x32xf32> to vector<2x32xf32>
    %251 = vector.shape_cast %242 : vector<2x32xf32> to vector<1x2x32xf32>
    tpu.vector_store %arg7[%c0_72, %c0_73, %c0_74], %251 {strides = array<i32>} : memref<1x2x32xf32, #tpu.memory_space<vmem>>, vector<1x2x32xf32>,
    return
  }
  func.func @transform_0(%arg0: i32) -> (i32, i32) {
    %c0_i32 = arith.constant 0 : i32
    %c0_i32_0 = arith.constant 0 : i32
    %c0_i32_1 = arith.constant 0 : i32
    return %c0_i32, %c0_i32_0 : i32, i32
  }
  func.func @transform_1(%arg0: i32) -> (i32, i32, i32) {
    %c0_i32 = arith.constant 0 : i32
    %c0_i32_0 = arith.constant 0 : i32
    %c0_i32_1 = arith.constant 0 : i32
    return %arg0, %c0_i32, %c0_i32_0 : i32, i32, i32
  }
  func.func @transform_2(%arg0: i32) -> (i32, i32, i32) {
    %c0_i32 = arith.constant 0 : i32
    %c0_i32_0 = arith.constant 0 : i32
    %c0_i32_1 = arith.constant 0 : i32
    return %arg0, %c0_i32, %c0_i32_0 : i32, i32, i32
  }
  func.func @transform_3(%arg0: i32) -> (i32, i32, i32) {
    %c0_i32 = arith.constant 0 : i32
    %c0_i32_0 = arith.constant 0 : i32
    %c0_i32_1 = arith.constant 0 : i32
    return %arg0, %c0_i32, %c0_i32_0 : i32, i32, i32
  }
  func.func @transform_4(%arg0: i32) -> (i32, i32) {
    %c0_i32 = arith.constant 0 : i32
    %c0_i32_0 = arith.constant 0 : i32
    %c0_i32_1 = arith.constant 0 : i32
    return %c0_i32, %c0_i32_0 : i32, i32
  }
  func.func @transform_5(%arg0: i32) -> (i32, i32, i32) {
    %c0_i32 = arith.constant 0 : i32
    %c0_i32_0 = arith.constant 0 : i32
    %c0_i32_1 = arith.constant 0 : i32
    return %arg0, %c0_i32, %c0_i32_0 : i32, i32, i32
  }
  func.func @transform_6(%arg0: i32) -> (i32, i32, i32) {
    %c0_i32 = arith.constant 0 : i32
    %c0_i32_0 = arith.constant 0 : i32
    %c0_i32_1 = arith.constant 0 : i32
    return %arg0, %c0_i32, %c0_i32_0 : i32, i32, i32
  }
}

</mosaic_0001>

<llo_original>
// kernel: tpu_custom_call.1
$region0: #{tpu_custom_call.1}
  #allocation0 [shape = 'u32[]', space=smem, size = 0x4, offset = 0x4, fixed_abs, tag = 'smem constant byte address 0x4 - core index']
  #allocation1 [shape = 'u32[144,128]{1,0:T(1,128)}', space=vmem, size = 0x12000, scoped, tag = 'internal scratch']
  #allocation2 [shape = 'f32[16,128]{1,0:T(8,128)}', space=vmem, size = 0x2000, scoped, tag = 'scratch operand']
  %s0 = inlined_call_operand.hbm [shape: f32[16,32], index: 0, kind: input, shape index: {}]
  %s1 = inlined_call_operand.hbm [shape: f32[2,32,128], index: 1, kind: input, shape index: {}]
  %s2 = inlined_call_operand.hbm [shape: f32[2,32,128], index: 2, kind: input, shape index: {}]
  %s3 = inlined_call_operand.vmem [shape: f32[2,1,128], index: 3, kind: input, shape index: {}]
  %s4 = inlined_call_operand.hbm [shape: f32[16,32], index: 4, kind: output, shape index: {0}]
  %s5 = inlined_call_operand.hbm [shape: f32[2,2,32], index: 5, kind: output, shape index: {1}]
  %s6 = inlined_call_operand.hbm [shape: f32[2,2,32], index: 6, kind: output, shape index: {2}]
  %7 = xla_tuple %s4, %s5, %s6
  %s8 = sld [smem:[#allocation0]]
  $region85: #{tpu_custom_call.1} parent=0
    _
  %s10 = ssub.s32 1, %s8
  %s11 = scalar_select 0, %s10, %s8
  $region1: #{tpu_custom_call.1} parent=0
    #allocation3 [shape = 'u8[8192]{0}', space=vmem, size = 0x2000, scoped, tag = 'input window, operand 0, single buffered']
    #allocation4 [shape = 's32[2]{0}', space=sflag, size = 0x8, scoped, tag = 'scoped memory for tpu_custom_call.1']
    #allocation5 [shape = 's32[2]{0}', space=sflag, size = 0x8, scoped, tag = 'scoped memory for tpu_custom_call.1']
    #allocation6 [shape = 'u8[32768]{0}', space=vmem, size = 0x8000, scoped, tag = 'input window, operand 1']
    #allocation7 [shape = 's32[2]{0}', space=sflag, size = 0x8, scoped, tag = 'scoped memory for tpu_custom_call.1']
    #allocation8 [shape = 'u8[32768]{0}', space=vmem, size = 0x8000, scoped, tag = 'input window, operand 2']
    #allocation9 [shape = 'u8[8192]{0}', space=vmem, size = 0x2000, scoped, tag = 'output window, operand 0, single buffered']
    #allocation10 [shape = 'u8[2048]{0}', space=vmem, size = 0x800, scoped, tag = 'output window, operand 1']
    #allocation11 [shape = 's32[2]{0}', space=sflag, size = 0x8, scoped, tag = 'scoped memory for tpu_custom_call.1']
    #allocation12 [shape = 'u8[2048]{0}', space=vmem, size = 0x800, scoped, tag = 'output window, operand 2']
    %12 = vsyncpa [#allocation4], 0
    %13 = vsyncpa [#allocation7], 0
    %s14 = scalar_lea.sflag [#allocation7], 1
    %15 = vsyncpa %s14, 0
    %16 = vsyncpa [#allocation5], 0
    %17 = vsyncpa [#allocation11], 0
    %s18 = scalar_lea.sflag [#allocation11], 1
    %19 = vsyncpa %s18, 0
    loop: start=0, step=1, limit=4
    $region2: #{tpu_custom_call.1} parent=1 // loop_pre_header
      _
    $region3: #{tpu_custom_call.1} parent=1 // loop_header
      %s21 = sphi 0, %s25
      %p22 = scmp.ge.s32.totalorder %s21, 4
      %s29 = sphi 0, %s29
      %s31 = sphi 0, %s29
      %s32 = sphi 0, %s31
      %s46 = sphi 0, %s32
      %s52 = sphi 0, %s54
      %s55 = sphi 0, %s52
      %s56 = sphi 0, %s55
      %s72 = sphi 0, %s56
      %s78 = sphi 0, %s80
      %s81 = sphi 0, %s78
      %s82 = sphi 0, %s81
      %s98 = sphi 0, %s82
      %s104 = sphi 0, %s106
      %s107 = sphi 0, %s104
      %s108 = sphi 0, %s107
      %s124 = sphi 0, %s108
      %s128 = sphi 0, %s128
      %s130 = sphi 0, %s128
      %s131 = sphi 0, %s130
      %s145 = sphi 0, %s131
      %s151 = sphi 0, %s153
      %s154 = sphi 0, %s151
      %s155 = sphi 0, %s154
      %s171 = sphi 0, %s155
      %s177 = sphi 0, %s179
      %s180 = sphi 0, %s177
      %s181 = sphi 0, %s180
      %s197 = sphi 0, %s181
    $region4: #{tpu_custom_call.1} parent=1 // loop_header_branch
      %24 = sbr.rel (%p22) target = $region8
    $region5: #{tpu_custom_call.1} parent=1 // loop_body
      %s26 = ssub.s32 %s21, 1
      %s27 = ssub.s32 %s21, 2
      %s28 = sadd.s32 %s21, 1
      %s30 = sadd.s32 %s29, 1
      %p33 = scmp.eq.s32.totalorder %s21, 1
      %p34 = scmp.ne.s32.totalorder %s29, %s31
      %p35 = scmp.eq.s32.totalorder %s21, 0
      %p36 = por %p34, %p35
      %p37 = scmp.ne.s32.totalorder %s29, %s31
      %p38 = scmp.eq.s32.totalorder %s26, 1
      %p39 = por %p37, %p38
      %p40 = scmp.ne.s32.totalorder %s31, %s32
      %p41 = scmp.eq.s32.totalorder %s26, 0
      %p42 = por %p40, %p41
      %p43 = scmp.ne.s32.totalorder %s31, %s32
      %p44 = scmp.eq.s32.totalorder %s27, 1
      %p45 = por %p43, %p44
      %p47 = scmp.ne.s32.totalorder %s32, %s46
      %p48 = scmp.eq.s32.totalorder %s27, 0
      %p49 = por %p47, %p48
      %s50 = ssub.s32 %s21, %s28
      %p51 = scmp.eq.s32.totalorder %s50, 0
      %s53 = sadd.s32 %s52, 1
      %s54 = scalar_select %p51, %s52, %s53
      %p57 = pneg %p51
      %p58 = scmp.eq.s32.totalorder %s21, 1
      %p59 = por %p57, %p58
      %p60 = scmp.ne.s32.totalorder %s52, %s55
      %p61 = scmp.eq.s32.totalorder %s21, 0
      %p62 = por %p60, %p61
      %p63 = scmp.ne.s32.totalorder %s52, %s55
      %p64 = scmp.eq.s32.totalorder %s26, 1
      %p65 = por %p63, %p64
      %p66 = scmp.ne.s32.totalorder %s55, %s56
      %p67 = scmp.eq.s32.totalorder %s26, 0
      %p68 = por %p66, %p67
      %p69 = scmp.ne.s32.totalorder %s55, %s56
      %p70 = scmp.eq.s32.totalorder %s27, 1
      %p71 = por %p69, %p70
      %p73 = scmp.ne.s32.totalorder %s56, %s72
      %p74 = scmp.eq.s32.totalorder %s27, 0
      %p75 = por %p73, %p74
      %s76 = ssub.s32 %s21, %s28
      %p77 = scmp.eq.s32.totalorder %s76, 0
      %s79 = sadd.s32 %s78, 1
      %s80 = scalar_select %p77, %s78, %s79
      %p83 = pneg %p77
      %p84 = scmp.eq.s32.totalorder %s21, 1
      %p85 = por %p83, %p84
      %p86 = scmp.ne.s32.totalorder %s78, %s81
      %p87 = scmp.eq.s32.totalorder %s21, 0
      %p88 = por %p86, %p87
      %p89 = scmp.ne.s32.totalorder %s78, %s81
      %p90 = scmp.eq.s32.totalorder %s26, 1
      %p91 = por %p89, %p90
      %p92 = scmp.ne.s32.totalorder %s81, %s82
      %p93 = scmp.eq.s32.totalorder %s26, 0
      %p94 = por %p92, %p93
      %p95 = scmp.ne.s32.totalorder %s81, %s82
      %p96 = scmp.eq.s32.totalorder %s27, 1
      %p97 = por %p95, %p96
      %p99 = scmp.ne.s32.totalorder %s82, %s98
      %p100 = scmp.eq.s32.totalorder %s27, 0
      %p101 = por %p99, %p100
      %s102 = ssub.s32 %s21, %s28
      %p103 = scmp.eq.s32.totalorder %s102, 0
      %s105 = sadd.s32 %s104, 1
      %s106 = scalar_select %p103, %s104, %s105
      %p109 = pneg %p103
      %p110 = scmp.eq.s32.totalorder %s21, 1
      %p111 = por %p109, %p110
      %p112 = scmp.ne.s32.totalorder %s104, %s107
      %p113 = scmp.eq.s32.totalorder %s21, 0
      %p114 = por %p112, %p113
      %p115 = scmp.ne.s32.totalorder %s104, %s107
      %p116 = scmp.eq.s32.totalorder %s26, 1
      %p117 = por %p115, %p116
      %p118 = scmp.ne.s32.totalorder %s107, %s108
      %p119 = scmp.eq.s32.totalorder %s26, 0
      %p120 = por %p118, %p119
      %p121 = scmp.ne.s32.totalorder %s107, %s108
      %p122 = scmp.eq.s32.totalorder %s27, 1
      %p123 = por %p121, %p122
      %p125 = scmp.ne.s32.totalorder %s108, %s124
      %p126 = scmp.eq.s32.totalorder %s27, 0
      %p127 = por %p125, %p126
      %s129 = sadd.s32 %s128, 1
      %p132 = scmp.eq.s32.totalorder %s21, 1
      %p133 = scmp.ne.s32.totalorder %s128, %s130
      %p134 = scmp.eq.s32.totalorder %s21, 0
      %p135 = por %p133, %p134
      %p136 = scmp.ne.s32.totalorder %s128, %s130
      %p137 = scmp.eq.s32.totalorder %s26, 1
      %p138 = por %p136, %p137
      %p139 = scmp.ne.s32.totalorder %s130, %s131
      %p140 = scmp.eq.s32.totalorder %s26, 0
      %p141 = por %p139, %p140
      %p142 = scmp.ne.s32.totalorder %s130, %s131
      %p143 = scmp.eq.s32.totalorder %s27, 1
      %p144 = por %p142, %p143
      %p146 = scmp.ne.s32.totalorder %s131, %s145
      %p147 = scmp.eq.s32.totalorder %s27, 0
      %p148 = por %p146, %p147
      %s149 = ssub.s32 %s21, %s28
      %p150 = scmp.eq.s32.totalorder %s149, 0
      %s152 = sadd.s32 %s151, 1
      %s153 = scalar_select %p150, %s151, %s152
      %p156 = pneg %p150
      %p157 = scmp.eq.s32.totalorder %s21, 1
      %p158 = por %p156, %p157
      %p159 = scmp.ne.s32.totalorder %s151, %s154
      %p160 = scmp.eq.s32.totalorder %s21, 0
      %p161 = por %p159, %p160
      %p162 = scmp.ne.s32.totalorder %s151, %s154
      %p163 = scmp.eq.s32.totalorder %s26, 1
      %p164 = por %p162, %p163
      %p165 = scmp.ne.s32.totalorder %s154, %s155
      %p166 = scmp.eq.s32.totalorder %s26, 0
      %p167 = por %p165, %p166
      %p168 = scmp.ne.s32.totalorder %s154, %s155
      %p169 = scmp.eq.s32.totalorder %s27, 1
      %p170 = por %p168, %p169
      %p172 = scmp.ne.s32.totalorder %s155, %s171
      %p173 = scmp.eq.s32.totalorder %s27, 0
      %p174 = por %p172, %p173
      %s175 = ssub.s32 %s21, %s28
      %p176 = scmp.eq.s32.totalorder %s175, 0
      %s178 = sadd.s32 %s177, 1
      %s179 = scalar_select %p176, %s177, %s178
      %p182 = pneg %p176
      %p183 = scmp.eq.s32.totalorder %s21, 1
      %p184 = por %p182, %p183
      %p185 = scmp.ne.s32.totalorder %s177, %s180
      %p186 = scmp.eq.s32.totalorder %s21, 0
      %p187 = por %p185, %p186
      %p188 = scmp.ne.s32.totalorder %s177, %s180
      %p189 = scmp.eq.s32.totalorder %s26, 1
      %p190 = por %p188, %p189
      %p191 = scmp.ne.s32.totalorder %s180, %s181
      %p192 = scmp.eq.s32.totalorder %s26, 0
      %p193 = por %p191, %p192
      %p194 = scmp.ne.s32.totalorder %s180, %s181
      %p195 = scmp.eq.s32.totalorder %s27, 1
      %p196 = por %p194, %p195
      %p198 = scmp.ne.s32.totalorder %s181, %s197
      %p199 = scmp.eq.s32.totalorder %s27, 0
      %p200 = por %p198, %p199
      %p201 = scmp.le.s32.totalorder 1, %s21
      %p202 = scmp.lt.s32.totalorder %s21, 3
      %p203 = pnand %p201, %p202
      %p204 = pneg %p203
      // Predicated region
      $region9: #{tpu_custom_call.1} parent=5 // pred_check
        _
      $region10: #{tpu_custom_call.1} parent=5 // pred_check_branch
        %206 = sbr.rel (%p203) target = $region12
      $region11: #{tpu_custom_call.1} parent=5 // pred_region
        %s207 = ssub.s32 %s21, 1
        // Predicated region
        $region13: #{tpu_custom_call.1} parent=11 // pred_check
          %p208 = pneg %p42
        $region14: #{tpu_custom_call.1} parent=11 // pred_check_branch
          %210 = sbr.rel (%p208) target = $region16
        $region15: #{tpu_custom_call.1} parent=11 // pred_region
          %s212 = ssub.s32 256, 256
          %213 = vsyncadd [#allocation4], %s212
          %s214 = sshll.u32 [#allocation3], 4
          %s215 = int_to_ptr.vmem [resolvable:$true] %s214
          %220 = dma.hbm_to_vmem [thread:$0]  %s0, 256, %s215, [#allocation4], 128, 128, 8
        $region16: #{tpu_custom_call.1} parent=11 // pred_fallthru
          _
      $region12: #{tpu_custom_call.1} parent=5 // pred_fallthru
        _
      %p221 = scmp.lt.s32.totalorder %s21, 2
      // Predicated region
      $region17: #{tpu_custom_call.1} parent=5 // pred_check
        %p222 = pneg %p221
      $region18: #{tpu_custom_call.1} parent=5 // pred_check_branch
        %224 = sbr.rel (%p222) target = $region20
      $region19: #{tpu_custom_call.1} parent=5 // pred_region
        // Predicated region
        $region21: #{tpu_custom_call.1} parent=19 // pred_check
          %p225 = pneg %p62
        $region22: #{tpu_custom_call.1} parent=19 // pred_check_branch
          %227 = sbr.rel (%p225) target = $region24
        $region23: #{tpu_custom_call.1} parent=19 // pred_region
          %s228 = sand.u32 %s21, 1
          %s229 = scalar_lea.sflag [#allocation7], %s228
          %s230 = sand.u32 %s52, 1
          %s231 = smul.addr %s230, 32
          %s232 = scalar_lea.vmem [#allocation6], %s231
          %s234 = ssub.s32 512, 512
          %235 = vsyncadd %s229, %s234
          %s236 = smul.addr %s21, 4
          %s237 = smul.addr %s236, 128
          %s238 = scalar_lea.hbm %s1, %s237
          %s239 = sshll.u32 %s232, 4
          %s240 = int_to_ptr.vmem [resolvable:$true] %s239
          %245 = dma.hbm_to_vmem [thread:$0]  %s238, 512, %s240, %s229, 128, 128, 8
        $region24: #{tpu_custom_call.1} parent=19 // pred_fallthru
          _
        // Predicated region
        $region25: #{tpu_custom_call.1} parent=19 // pred_check
          %p246 = pneg %p88
        $region26: #{tpu_custom_call.1} parent=19 // pred_check_branch
          %248 = sbr.rel (%p246) target = $region28
        $region27: #{tpu_custom_call.1} parent=19 // pred_region
          %s249 = sand.u32 %s21, 1
          %s250 = scalar_lea.sflag [#allocation7], %s249
          %s251 = sand.u32 %s78, 1
          %s252 = smul.addr %s251, 32
          %s253 = scalar_lea.vmem [#allocation8], %s252
          %s255 = ssub.s32 512, 512
          %256 = vsyncadd %s250, %s255
          %s257 = smul.addr %s21, 4
          %s258 = smul.addr %s257, 128
          %s259 = scalar_lea.hbm %s2, %s258
          %s260 = sshll.u32 %s253, 4
          %s261 = int_to_ptr.vmem [resolvable:$true] %s260
          %266 = dma.hbm_to_vmem [thread:$0]  %s259, 512, %s261, %s250, 128, 128, 8
        $region28: #{tpu_custom_call.1} parent=19 // pred_fallthru
          _
        // Predicated region
        $region29: #{tpu_custom_call.1} parent=19 // pred_check
          %p267 = pneg %p114
        $region30: #{tpu_custom_call.1} parent=19 // pred_check_branch
          %269 = sbr.rel (%p267) target = $region32
        $region31: #{tpu_custom_call.1} parent=19 // pred_region
          %p270 = scmp.lt.s32.totalorder %s21, 1
          %s271 = scalar_select %p270, %s21, 1
          %s272 = scalar_lea.vmem %s3, %s271
        $region32: #{tpu_custom_call.1} parent=19 // pred_fallthru
          _
      $region20: #{tpu_custom_call.1} parent=5 // pred_fallthru
        _
      %p273 = scmp.le.s32.totalorder 1, %s21
      %p274 = scmp.lt.s32.totalorder %s21, 3
      %p275 = pnand %p273, %p274
      %p276 = pneg %p275
      // Predicated region
      $region33: #{tpu_custom_call.1} parent=5 // pred_check
        _
      $region34: #{tpu_custom_call.1} parent=5 // pred_check_branch
        %278 = sbr.rel (%p275) target = $region36
      $region35: #{tpu_custom_call.1} parent=5 // pred_region
        %s279 = ssub.s32 %s21, 1
        // Predicated region
        $region37: #{tpu_custom_call.1} parent=35 // pred_check
          %p280 = pneg %p42
        $region38: #{tpu_custom_call.1} parent=35 // pred_check_branch
          %282 = sbr.rel (%p280) target = $region40
        $region39: #{tpu_custom_call.1} parent=35 // pred_region
          %283 = dma.done [#allocation4], 256
        $region40: #{tpu_custom_call.1} parent=35 // pred_fallthru
          _
        %s284 = sand.u32 %s26, 1
        %s285 = scalar_lea.sflag [#allocation7], %s284
        %s286 = sand.u32 %s55, 1
        %s287 = smul.addr %s286, 32
        %s288 = scalar_lea.vmem [#allocation6], %s287
        // Predicated region
        $region41: #{tpu_custom_call.1} parent=35 // pred_check
          %p289 = pneg %p68
        $region42: #{tpu_custom_call.1} parent=35 // pred_check_branch
          %291 = sbr.rel (%p289) target = $region44
        $region43: #{tpu_custom_call.1} parent=35 // pred_region
          %292 = dma.done %s285, 512
        $region44: #{tpu_custom_call.1} parent=35 // pred_fallthru
          _
        %s293 = sand.u32 %s26, 1
        %s294 = scalar_lea.sflag [#allocation7], %s293
        %s295 = sand.u32 %s81, 1
        %s296 = smul.addr %s295, 32
        %s297 = scalar_lea.vmem [#allocation8], %s296
        // Predicated region
        $region45: #{tpu_custom_call.1} parent=35 // pred_check
          %p298 = pneg %p94
        $region46: #{tpu_custom_call.1} parent=35 // pred_check_branch
          %300 = sbr.rel (%p298) target = $region48
        $region47: #{tpu_custom_call.1} parent=35 // pred_region
          %301 = dma.done %s294, 512
        $region48: #{tpu_custom_call.1} parent=35 // pred_fallthru
          _
        %p302 = pneg %p42
        %p303 = pneg %p39
        %s304 = sand.u32 %s26, 1
        %s305 = scalar_lea.sflag [#allocation7], %s304
        %s306 = sand.u32 %s55, 1
        %s307 = smul.addr %s306, 32
        %s308 = scalar_lea.vmem [#allocation6], %s307
        %p309 = pneg %p68
        %p310 = pneg %p65
        %s311 = sand.u32 %s26, 1
        %s312 = scalar_lea.sflag [#allocation7], %s311
        %s313 = sand.u32 %s81, 1
        %s314 = smul.addr %s313, 32
        %s315 = scalar_lea.vmem [#allocation8], %s314
        %p316 = pneg %p94
        %p317 = pneg %p91
        %p318 = scmp.lt.s32.totalorder %s26, 1
        %s319 = scalar_select %p318, %s26, 1
        %s320 = scalar_lea.vmem %s3, %s319
        %p321 = pneg %p120
        %p322 = pneg %p117
        %p323 = pneg %p141
        %p324 = pneg %p138
        %p325 = pneg %p167
        %p326 = pneg %p164
        %s327 = sand.u32 %s26, 1
        %s328 = scalar_lea.sflag [#allocation11], %s327
        %s329 = sand.u32 %s154, 1
        %s330 = smul.addr %s329, 2
        %s331 = scalar_lea.vmem [#allocation10], %s330
        %p332 = pneg %p193
        %p333 = pneg %p190
        %s334 = sand.u32 %s26, 1
        %s335 = scalar_lea.sflag [#allocation11], %s334
        %s336 = sand.u32 %s180, 1
        %s337 = smul.addr %s336, 2
        %s338 = scalar_lea.vmem [#allocation12], %s337
        %p339 = scmp.lt.s32.totalorder %s26, 1
        %s340 = scalar_select %p339, %s26, 1
        %s341 = scalar_lea.vmem %s3, %s340
        %v342 = vld [vmem:[%s288] sm:$0xff]
        %v343 = vld [vmem:[%s288 + $0x8] sm:$0xff]
        %v344 = vld [vmem:[%s288 + $0x10] sm:$0xff]
        %v345 = vld [vmem:[%s288 + $0x18] sm:$0xff]
        %v346 = vld [vmem:[%s297] sm:$0xff]
        %v347 = vld [vmem:[%s297 + $0x8] sm:$0xff]
        %v348 = vld [vmem:[%s297 + $0x10] sm:$0xff]
        %v349 = vld [vmem:[%s297 + $0x18] sm:$0xff]
        %v350 = vld [vmem:[%s341] sm:$0x1]
        %p351 = scmp.eq.s32.totalorder %s26, 0
        // Predicated region
        $region49: #{tpu_custom_call.1} parent=35 // pred_check
          %p352 = pneg %p351
        $region50: #{tpu_custom_call.1} parent=35 // pred_check_branch
          %354 = sbr.rel (%p352) target = $region52
        $region51: #{tpu_custom_call.1} parent=35 // pred_region
          %v355 = vld [vmem:[#allocation3] sm:$0xff]
          %v356 = vld [vmem:[#allocation3 + $0x8] sm:$0xff]
          %v358 = vlaneseq
          %v359 = vshrl.u32 %v358, 7
          %v360 = vsub.s32 0, %v359
          %v361 = vrot.slane %v350, %v360
          %vm363 = vcmask 261120
          %v365 = vsel %vm363, %v355, 0
          %v368 = vsel %vm363, %v356, 0
          %370 = vmatprep.subr.mxu0 0.0
          %371 = vmatpush1.msra.mxu0 %v342
          %372 = vmatprep.subr.mxu0 0.0
          %373 = vmatpush1.msra.mxu0 %v343
          %374 = vmatprep.subr.mxu0 0.0
          %375 = vmatpush1.msra.mxu0 %v344
          %376 = vmatprep.subr.mxu0 0.0
          %377 = vmatpush1.msra.mxu0 %v345
          %378 = vmatprep.subr.mxu0 0.0
          %379 = vmatpush1.msra.mxu0 0.0
          %380 = vmatprep.subr.mxu0 0.0
          %381 = vmatpush1.msra.mxu0 0.0
          %382 = vmatprep.subr.mxu0 0.0
          %383 = vmatpush1.msra.mxu0 0.0
          %384 = vmatprep.subr.mxu0 0.0
          %385 = vmatpush1.msra.mxu0 0.0
          %386 = vmatprep.subr.mxu0 0.0
          %387 = vmatpush1.msra.mxu0 0.0
          %388 = vmatprep.subr.mxu0 0.0
          %389 = vmatpush1.msra.mxu0 0.0
          %390 = vmatprep.subr.mxu0 0.0
          %391 = vmatpush1.msra.mxu0 0.0
          %392 = vmatprep.subr.mxu0 0.0
          %393 = vmatpush1.msra.mxu0 0.0
          %394 = vmatprep.subr.mxu0 0.0
          %395 = vmatpush1.msra.mxu0 0.0
          %396 = vmatprep.subr.mxu0 0.0
          %397 = vmatpush1.msra.mxu0 0.0
          %398 = vmatprep.subr.mxu0 0.0
          %399 = vmatpush1.msra.mxu0 0.0
          %400 = vmatprep.subr.mxu0 0.0
          %401 = vmatpush1.msra.mxu0 0.0
          %402 = vmatprep.subr.mxu0 0.0
          %403 = vmatpush1.msra.mxu0 0.0
          %404 = vmatprep.subr.mxu0 0.0
          %405 = vmatpush1.msra.mxu0 0.0
          %406 = vmatprep.subr.mxu0 0.0
          %407 = vmatpush1.msra.mxu0 0.0
          %408 = vmatprep.subr.mxu0 0.0
          %409 = vmatpush1.msra.mxu0 0.0
          %410 = vmatprep.subr.mxu0 0.0
          %411 = vmatpush1.msra.mxu0 0.0
          %412 = vmatprep.subr.mxu0 0.0
          %413 = vmatpush1.msra.mxu0 0.0
          %414 = vmatprep.subr.mxu0 0.0
          %415 = vmatpush1.msra.mxu0 0.0
          %416 = vmatprep.subr.mxu0 0.0
          %417 = vmatpush1.msra.mxu0 0.0
          %418 = vmatprep.subr.mxu0 0.0
          %419 = vmatpush1.msra.mxu0 0.0
          %420 = vmatprep.subr.mxu0 0.0
          %421 = vmatpush1.msra.mxu0 0.0
          %422 = vmatprep.subr.mxu0 0.0
          %423 = vmatpush1.msra.mxu0 0.0
          %424 = vmatprep.subr.mxu0 0.0
          %425 = vmatpush1.msra.mxu0 0.0
          %426 = vmatprep.subr.mxu0 0.0
          %427 = vmatpush1.msra.mxu0 0.0
          %428 = vmatprep.subr.mxu0 0.0
          %429 = vmatpush1.msra.mxu0 0.0
          %430 = vmatprep.subr.mxu0 0.0
          %431 = vmatpush1.msra.mxu0 0.0
          %432 = vmatprep.subr.mxu0 0.0
          %433 = vmatpush1.msra.mxu0 0.0
          %434 = vmatprep.mubr.f32.mxu0 0.0
          %435 = vmatmul.mubr.f32.gmra.mrb[0].mxu0 %v365
          %v436 = vpop.f32.mrb[0].mxu0
          %v437 = vadd.f32 %v361, %v436
          %v438 = vpop.f32.mrb[0].mxu0
          %439 = vmatprep.mubr.f32.mxu0 0.0
          %440 = vmatmul.mubr.f32.gmra.mrb[0].mxu0 %v368
          %v441 = vpop.f32.mrb[0].mxu0
          %v442 = vadd.f32 %v361, %v441
          %v443 = vpop.f32.mrb[0].mxu0
          %444 = vdwg.mxu0
          %445 = vst [vmem:[#allocation2] sm:$0xff] %v437
          %446 = vst [vmem:[#allocation2 + $0x8] sm:$0xff] %v442
        $region52: #{tpu_custom_call.1} parent=35 // pred_fallthru
          _
        %p447 = scmp.gt.s32.totalorder %s26, 0
        // Predicated region
        $region53: #{tpu_custom_call.1} parent=35 // pred_check
          %p448 = pneg %p447
        $region54: #{tpu_custom_call.1} parent=35 // pred_check_branch
          %450 = sbr.rel (%p448) target = $region56
        $region55: #{tpu_custom_call.1} parent=35 // pred_region
          %v451 = vld [vmem:[#allocation9] sm:$0xff]
          %v452 = vld [vmem:[#allocation9 + $0x8] sm:$0xff]
          %v454 = vlaneseq
          %v455 = vshrl.u32 %v454, 7
          %v456 = vsub.s32 0, %v455
          %v457 = vrot.slane %v350, %v456
          %vm459 = vcmask 261120
          %v461 = vsel %vm459, %v451, 0
          %v464 = vsel %vm459, %v452, 0
          %466 = vmatprep.subr.mxu0 0.0
          %467 = vmatpush1.msra.mxu0 %v342
          %468 = vmatprep.subr.mxu0 0.0
          %469 = vmatpush1.msra.mxu0 %v343
          %470 = vmatprep.subr.mxu0 0.0
          %471 = vmatpush1.msra.mxu0 %v344
          %472 = vmatprep.subr.mxu0 0.0
          %473 = vmatpush1.msra.mxu0 %v345
          %474 = vmatprep.subr.mxu0 0.0
          %475 = vmatpush1.msra.mxu0 0.0
          %476 = vmatprep.subr.mxu0 0.0
          %477 = vmatpush1.msra.mxu0 0.0
          %478 = vmatprep.subr.mxu0 0.0
          %479 = vmatpush1.msra.mxu0 0.0
          %480 = vmatprep.subr.mxu0 0.0
          %481 = vmatpush1.msra.mxu0 0.0
          %482 = vmatprep.subr.mxu0 0.0
          %483 = vmatpush1.msra.mxu0 0.0
          %484 = vmatprep.subr.mxu0 0.0
          %485 = vmatpush1.msra.mxu0 0.0
          %486 = vmatprep.subr.mxu0 0.0
          %487 = vmatpush1.msra.mxu0 0.0
          %488 = vmatprep.subr.mxu0 0.0
          %489 = vmatpush1.msra.mxu0 0.0
          %490 = vmatprep.subr.mxu0 0.0
          %491 = vmatpush1.msra.mxu0 0.0
          %492 = vmatprep.subr.mxu0 0.0
          %493 = vmatpush1.msra.mxu0 0.0
          %494 = vmatprep.subr.mxu0 0.0
          %495 = vmatpush1.msra.mxu0 0.0
          %496 = vmatprep.subr.mxu0 0.0
          %497 = vmatpush1.msra.mxu0 0.0
          %498 = vmatprep.subr.mxu0 0.0
          %499 = vmatpush1.msra.mxu0 0.0
          %500 = vmatprep.subr.mxu0 0.0
          %501 = vmatpush1.msra.mxu0 0.0
          %502 = vmatprep.subr.mxu0 0.0
          %503 = vmatpush1.msra.mxu0 0.0
          %504 = vmatprep.subr.mxu0 0.0
          %505 = vmatpush1.msra.mxu0 0.0
          %506 = vmatprep.subr.mxu0 0.0
          %507 = vmatpush1.msra.mxu0 0.0
          %508 = vmatprep.subr.mxu0 0.0
          %509 = vmatpush1.msra.mxu0 0.0
          %510 = vmatprep.subr.mxu0 0.0
          %511 = vmatpush1.msra.mxu0 0.0
          %512 = vmatprep.subr.mxu0 0.0
          %513 = vmatpush1.msra.mxu0 0.0
          %514 = vmatprep.subr.mxu0 0.0
          %515 = vmatpush1.msra.mxu0 0.0
          %516 = vmatprep.subr.mxu0 0.0
          %517 = vmatpush1.msra.mxu0 0.0
          %518 = vmatprep.subr.mxu0 0.0
          %519 = vmatpush1.msra.mxu0 0.0
          %520 = vmatprep.subr.mxu0 0.0
          %521 = vmatpush1.msra.mxu0 0.0
          %522 = vmatprep.subr.mxu0 0.0
          %523 = vmatpush1.msra.mxu0 0.0
          %524 = vmatprep.subr.mxu0 0.0
          %525 = vmatpush1.msra.mxu0 0.0
          %526 = vmatprep.subr.mxu0 0.0
          %527 = vmatpush1.msra.mxu0 0.0
          %528 = vmatprep.subr.mxu0 0.0
          %529 = vmatpush1.msra.mxu0 0.0
          %530 = vmatprep.mubr.f32.mxu0 0.0
          %531 = vmatmul.mubr.f32.gmra.mrb[0].mxu0 %v461
          %v532 = vpop.f32.mrb[0].mxu0
          %v533 = vadd.f32 %v457, %v532
          %v534 = vpop.f32.mrb[0].mxu0
          %535 = vmatprep.mubr.f32.mxu0 0.0
          %536 = vmatmul.mubr.f32.gmra.mrb[0].mxu0 %v464
          %v537 = vpop.f32.mrb[0].mxu0
          %v538 = vadd.f32 %v457, %v537
          %v539 = vpop.f32.mrb[0].mxu0
          %540 = vdwg.mxu0
          %541 = vst [vmem:[#allocation2] sm:$0xff] %v533
          %542 = vst [vmem:[#allocation2 + $0x8] sm:$0xff] %v538
        $region56: #{tpu_custom_call.1} parent=35 // pred_fallthru
          _
        %v543 = vld [vmem:[#allocation2] sm:$0x3]
        %vm544 = vcmask 261120
        %v546 = vsel %vm544, 0.0, 0
        %548 = vmatprep.subr.mxu0 0.0
        %549 = vmatpush1.msra.mxu0 %v346
        %550 = vmatprep.subr.mxu0 0.0
        %551 = vmatpush1.msra.mxu0 %v347
        %552 = vmatprep.subr.mxu0 0.0
        %553 = vmatpush1.msra.mxu0 %v348
        %554 = vmatprep.subr.mxu0 0.0
        %555 = vmatpush1.msra.mxu0 %v349
        %556 = vmatprep.subr.mxu0 0.0
        %557 = vmatpush1.msra.mxu0 0.0
        %558 = vmatprep.subr.mxu0 0.0
        %559 = vmatpush1.msra.mxu0 0.0
        %560 = vmatprep.subr.mxu0 0.0
        %561 = vmatpush1.msra.mxu0 0.0
        %562 = vmatprep.subr.mxu0 0.0
        %563 = vmatpush1.msra.mxu0 0.0
        %564 = vmatprep.subr.mxu0 0.0
        %565 = vmatpush1.msra.mxu0 0.0
        %566 = vmatprep.subr.mxu0 0.0
        %567 = vmatpush1.msra.mxu0 0.0
        %568 = vmatprep.subr.mxu0 0.0
        %569 = vmatpush1.msra.mxu0 0.0
        %570 = vmatprep.subr.mxu0 0.0
        %571 = vmatpush1.msra.mxu0 0.0
        %572 = vmatprep.subr.mxu0 0.0
        %573 = vmatpush1.msra.mxu0 0.0
        %574 = vmatprep.subr.mxu0 0.0
        %575 = vmatpush1.msra.mxu0 0.0
        %576 = vmatprep.subr.mxu0 0.0
        %577 = vmatpush1.msra.mxu0 0.0
        %578 = vmatprep.subr.mxu0 0.0
        %579 = vmatpush1.msra.mxu0 0.0
        %580 = vmatprep.subr.mxu0 0.0
        %581 = vmatpush1.msra.mxu0 0.0
        %582 = vmatprep.subr.mxu0 0.0
        %583 = vmatpush1.msra.mxu0 0.0
        %584 = vmatprep.subr.mxu0 0.0
        %585 = vmatpush1.msra.mxu0 0.0
        %586 = vmatprep.subr.mxu0 0.0
        %587 = vmatpush1.msra.mxu0 0.0
        %588 = vmatprep.subr.mxu0 0.0
        %589 = vmatpush1.msra.mxu0 0.0
        %590 = vmatprep.subr.mxu0 0.0
        %591 = vmatpush1.msra.mxu0 0.0
        %592 = vmatprep.subr.mxu0 0.0
        %593 = vmatpush1.msra.mxu0 0.0
        %594 = vmatprep.subr.mxu0 0.0
        %595 = vmatpush1.msra.mxu0 0.0
        %596 = vmatprep.subr.mxu0 0.0
        %597 = vmatpush1.msra.mxu0 0.0
        %598 = vmatprep.subr.mxu0 0.0
        %599 = vmatpush1.msra.mxu0 0.0
        %600 = vmatprep.subr.mxu0 0.0
        %601 = vmatpush1.msra.mxu0 0.0
        %602 = vmatprep.subr.mxu0 0.0
        %603 = vmatpush1.msra.mxu0 0.0
        %604 = vmatprep.subr.mxu0 0.0
        %605 = vmatpush1.msra.mxu0 0.0
        %606 = vmatprep.subr.mxu0 0.0
        %607 = vmatpush1.msra.mxu0 0.0
        %608 = vmatprep.subr.mxu0 0.0
        %609 = vmatpush1.msra.mxu0 0.0
        %610 = vmatprep.subr.mxu0 0.0
        %611 = vmatpush1.msra.mxu0 0.0
        %612 = vmatprep.mubr.f32.mxu0 0.0
        %613 = vmatmul.mubr.f32.gmra.mrb[0].mxu0 %v546
        %v614 = vpop.f32.mrb[0].mxu0
        %v615 = vadd.f32 0.0, %v614
        %v616 = vpop.f32.mrb[0].mxu0
        %617 = vdwg.mxu0
        %v618 = vadd.f32 %v543, %v615
        %v619 = vxor.u32 %v618, 2147483648
        %v620 = vmul.f32 %v619, 1.442695
        %v621 = vpow.pop %v620
        %v622 = vadd.f32 %v621, 1.0
        %v623 = vrcp.pop %v622
        %v624 = vmul.f32 1.0, %v623
        %v625 = vtanh.pop %v618
        %v626 = vmul.f32 %v624, 0.0
        %628 = vrot.lane.b32.xlu0 %v625, 64
        %v629 = vpop.permute.xlu0 %628
        %v631 = vmul.f32 %v624, %v629
        %633 = vrot.lane.b32.xlu0 %v631, 32
        %v634 = vpop.permute.xlu0 %633
        %v636 = vadd.f32 %v626, %v634
        %v637 = vtanh.pop %v636
        %639 = vrot.lane.b32.xlu0 %v637, 64
        %v640 = vpop.permute.xlu0 %639
        %v642 = vmul.f32 %v624, %v640
        %644 = vrot.lane.b32.xlu0 %v642, 32
        %v645 = vpop.permute.xlu0 %644
        %vm647 = vcmask 254976
        %648 = vst.msk [vmem:[#allocation9] sm:$0x3] %vm647, %v645
        %v649 = vld [vmem:[#allocation2 + $0x2] sm:$0x3]
        %v650 = vsel %vm544, %v645, 0
        %652 = vmatprep.subr.mxu0 0.0
        %653 = vmatpush1.msra.mxu0 %v346
        %654 = vmatprep.subr.mxu0 0.0
        %655 = vmatpush1.msra.mxu0 %v347
        %656 = vmatprep.subr.mxu0 0.0
        %657 = vmatpush1.msra.mxu0 %v348
        %658 = vmatprep.subr.mxu0 0.0
        %659 = vmatpush1.msra.mxu0 %v349
        %660 = vmatprep.subr.mxu0 0.0
        %661 = vmatpush1.msra.mxu0 0.0
        %662 = vmatprep.subr.mxu0 0.0
        %663 = vmatpush1.msra.mxu0 0.0
        %664 = vmatprep.subr.mxu0 0.0
        %665 = vmatpush1.msra.mxu0 0.0
        %666 = vmatprep.subr.mxu0 0.0
        %667 = vmatpush1.msra.mxu0 0.0
        %668 = vmatprep.subr.mxu0 0.0
        %669 = vmatpush1.msra.mxu0 0.0
        %670 = vmatprep.subr.mxu0 0.0
        %671 = vmatpush1.msra.mxu0 0.0
        %672 = vmatprep.subr.mxu0 0.0
        %673 = vmatpush1.msra.mxu0 0.0
        %674 = vmatprep.subr.mxu0 0.0
        %675 = vmatpush1.msra.mxu0 0.0
        %676 = vmatprep.subr.mxu0 0.0
        %677 = vmatpush1.msra.mxu0 0.0
        %678 = vmatprep.subr.mxu0 0.0
        %679 = vmatpush1.msra.mxu0 0.0
        %680 = vmatprep.subr.mxu0 0.0
        %681 = vmatpush1.msra.mxu0 0.0
        %682 = vmatprep.subr.mxu0 0.0
        %683 = vmatpush1.msra.mxu0 0.0
        %684 = vmatprep.subr.mxu0 0.0
        %685 = vmatpush1.msra.mxu0 0.0
        %686 = vmatprep.subr.mxu0 0.0
        %687 = vmatpush1.msra.mxu0 0.0
        %688 = vmatprep.subr.mxu0 0.0
        %689 = vmatpush1.msra.mxu0 0.0
        %690 = vmatprep.subr.mxu0 0.0
        %691 = vmatpush1.msra.mxu0 0.0
        %692 = vmatprep.subr.mxu0 0.0
        %693 = vmatpush1.msra.mxu0 0.0
        %694 = vmatprep.subr.mxu0 0.0
        %695 = vmatpush1.msra.mxu0 0.0
        %696 = vmatprep.subr.mxu0 0.0
        %697 = vmatpush1.msra.mxu0 0.0
        %698 = vmatprep.subr.mxu0 0.0
        %699 = vmatpush1.msra.mxu0 0.0
        %700 = vmatprep.subr.mxu0 0.0
        %701 = vmatpush1.msra.mxu0 0.0
        %702 = vmatprep.subr.mxu0 0.0
        %703 = vmatpush1.msra.mxu0 0.0
        %704 = vmatprep.subr.mxu0 0.0
        %705 = vmatpush1.msra.mxu0 0.0
        %706 = vmatprep.subr.mxu0 0.0
        %707 = vmatpush1.msra.mxu0 0.0
        %708 = vmatprep.subr.mxu0 0.0
        %709 = vmatpush1.msra.mxu0 0.0
        %710 = vmatprep.subr.mxu0 0.0
        %711 = vmatpush1.msra.mxu0 0.0
        %712 = vmatprep.subr.mxu0 0.0
        %713 = vmatpush1.msra.mxu0 0.0
        %714 = vmatprep.subr.mxu0 0.0
        %715 = vmatpush1.msra.mxu0 0.0
        %716 = vmatprep.mubr.f32.mxu0 0.0
        %717 = vmatmul.mubr.f32.gmra.mrb[0].mxu0 %v650
        %v718 = vpop.f32.mrb[0].mxu0
        %v719 = vadd.f32 0.0, %v718
        %v720 = vpop.f32.mrb[0].mxu0
        %721 = vdwg.mxu0
        %v722 = vadd.f32 %v649, %v719
        %v723 = vxor.u32 %v722, 2147483648
        %v724 = vmul.f32 %v723, 1.442695
        %v725 = vpow.pop %v724
        %v726 = vadd.f32 %v725, 1.0
        %v727 = vrcp.pop %v726
        %v728 = vmul.f32 1.0, %v727
        %v729 = vtanh.pop %v722
        %v730 = vmul.f32 %v728, %v636
        %732 = vrot.lane.b32.xlu0 %v729, 64
        %v733 = vpop.permute.xlu0 %732
        %v735 = vmul.f32 %v728, %v733
        %737 = vrot.lane.b32.xlu0 %v735, 32
        %v738 = vpop.permute.xlu0 %737
        %v740 = vadd.f32 %v730, %v738
        %v741 = vtanh.pop %v740
        %743 = vrot.lane.b32.xlu0 %v741, 64
        %v744 = vpop.permute.xlu0 %743
        %v746 = vmul.f32 %v728, %v744
        %748 = vrot.lane.b32.xlu0 %v746, 32
        %v749 = vpop.permute.xlu0 %748
        %751 = vst.msk [vmem:[#allocation9 + $0x2] sm:$0x3] %vm647, %v749
        %v752 = vld [vmem:[#allocation2 + $0x4] sm:$0x3]
        %v753 = vsel %vm544, %v749, 0
        %755 = vmatprep.subr.mxu0 0.0
        %756 = vmatpush1.msra.mxu0 %v346
        %757 = vmatprep.subr.mxu0 0.0
        %758 = vmatpush1.msra.mxu0 %v347
        %759 = vmatprep.subr.mxu0 0.0
        %760 = vmatpush1.msra.mxu0 %v348
        %761 = vmatprep.subr.mxu0 0.0
        %762 = vmatpush1.msra.mxu0 %v349
        %763 = vmatprep.subr.mxu0 0.0
        %764 = vmatpush1.msra.mxu0 0.0
        %765 = vmatprep.subr.mxu0 0.0
        %766 = vmatpush1.msra.mxu0 0.0
        %767 = vmatprep.subr.mxu0 0.0
        %768 = vmatpush1.msra.mxu0 0.0
        %769 = vmatprep.subr.mxu0 0.0
        %770 = vmatpush1.msra.mxu0 0.0
        %771 = vmatprep.subr.mxu0 0.0
        %772 = vmatpush1.msra.mxu0 0.0
        %773 = vmatprep.subr.mxu0 0.0
        %774 = vmatpush1.msra.mxu0 0.0
        %775 = vmatprep.subr.mxu0 0.0
        %776 = vmatpush1.msra.mxu0 0.0
        %777 = vmatprep.subr.mxu0 0.0
        %778 = vmatpush1.msra.mxu0 0.0
        %779 = vmatprep.subr.mxu0 0.0
        %780 = vmatpush1.msra.mxu0 0.0
        %781 = vmatprep.subr.mxu0 0.0
        %782 = vmatpush1.msra.mxu0 0.0
        %783 = vmatprep.subr.mxu0 0.0
        %784 = vmatpush1.msra.mxu0 0.0
        %785 = vmatprep.subr.mxu0 0.0
        %786 = vmatpush1.msra.mxu0 0.0
        %787 = vmatprep.subr.mxu0 0.0
        %788 = vmatpush1.msra.mxu0 0.0
        %789 = vmatprep.subr.mxu0 0.0
        %790 = vmatpush1.msra.mxu0 0.0
        %791 = vmatprep.subr.mxu0 0.0
        %792 = vmatpush1.msra.mxu0 0.0
        %793 = vmatprep.subr.mxu0 0.0
        %794 = vmatpush1.msra.mxu0 0.0
        %795 = vmatprep.subr.mxu0 0.0
        %796 = vmatpush1.msra.mxu0 0.0
        %797 = vmatprep.subr.mxu0 0.0
        %798 = vmatpush1.msra.mxu0 0.0
        %799 = vmatprep.subr.mxu0 0.0
        %800 = vmatpush1.msra.mxu0 0.0
        %801 = vmatprep.subr.mxu0 0.0
        %802 = vmatpush1.msra.mxu0 0.0
        %803 = vmatprep.subr.mxu0 0.0
        %804 = vmatpush1.msra.mxu0 0.0
        %805 = vmatprep.subr.mxu0 0.0
        %806 = vmatpush1.msra.mxu0 0.0
        %807 = vmatprep.subr.mxu0 0.0
        %808 = vmatpush1.msra.mxu0 0.0
        %809 = vmatprep.subr.mxu0 0.0
        %810 = vmatpush1.msra.mxu0 0.0
        %811 = vmatprep.subr.mxu0 0.0
        %812 = vmatpush1.msra.mxu0 0.0
        %813 = vmatprep.subr.mxu0 0.0
        %814 = vmatpush1.msra.mxu0 0.0
        %815 = vmatprep.subr.mxu0 0.0
        %816 = vmatpush1.msra.mxu0 0.0
        %817 = vmatprep.subr.mxu0 0.0
        %818 = vmatpush1.msra.mxu0 0.0
        %819 = vmatprep.mubr.f32.mxu0 0.0
        %820 = vmatmul.mubr.f32.gmra.mrb[0].mxu0 %v753
        %v821 = vpop.f32.mrb[0].mxu0
        %v822 = vadd.f32 0.0, %v821
        %v823 = vpop.f32.mrb[0].mxu0
        %824 = vdwg.mxu0
        %v825 = vadd.f32 %v752, %v822
        %v826 = vxor.u32 %v825, 2147483648
        %v827 = vmul.f32 %v826, 1.442695
        %v828 = vpow.pop %v827
        %v829 = vadd.f32 %v828, 1.0
        %v830 = vrcp.pop %v829
        %v831 = vmul.f32 1.0, %v830
        %v832 = vtanh.pop %v825
        %v833 = vmul.f32 %v831, %v740
        %835 = vrot.lane.b32.xlu0 %v832, 64
        %v836 = vpop.permute.xlu0 %835
        %v838 = vmul.f32 %v831, %v836
        %840 = vrot.lane.b32.xlu0 %v838, 32
        %v841 = vpop.permute.xlu0 %840
        %v843 = vadd.f32 %v833, %v841
        %v844 = vtanh.pop %v843
        %846 = vrot.lane.b32.xlu0 %v844, 64
        %v847 = vpop.permute.xlu0 %846
        %v849 = vmul.f32 %v831, %v847
        %851 = vrot.lane.b32.xlu0 %v849, 32
        %v852 = vpop.permute.xlu0 %851
        %854 = vst.msk [vmem:[#allocation9 + $0x4] sm:$0x3] %vm647, %v852
        %v855 = vld [vmem:[#allocation2 + $0x6] sm:$0x3]
        %v856 = vsel %vm544, %v852, 0
        %858 = vmatprep.subr.mxu0 0.0
        %859 = vmatpush1.msra.mxu0 %v346
        %860 = vmatprep.subr.mxu0 0.0
        %861 = vmatpush1.msra.mxu0 %v347
        %862 = vmatprep.subr.mxu0 0.0
        %863 = vmatpush1.msra.mxu0 %v348
        %864 = vmatprep.subr.mxu0 0.0
        %865 = vmatpush1.msra.mxu0 %v349
        %866 = vmatprep.subr.mxu0 0.0
        %867 = vmatpush1.msra.mxu0 0.0
        %868 = vmatprep.subr.mxu0 0.0
        %869 = vmatpush1.msra.mxu0 0.0
        %870 = vmatprep.subr.mxu0 0.0
        %871 = vmatpush1.msra.mxu0 0.0
        %872 = vmatprep.subr.mxu0 0.0
        %873 = vmatpush1.msra.mxu0 0.0
        %874 = vmatprep.subr.mxu0 0.0
        %875 = vmatpush1.msra.mxu0 0.0
        %876 = vmatprep.subr.mxu0 0.0
        %877 = vmatpush1.msra.mxu0 0.0
        %878 = vmatprep.subr.mxu0 0.0
        %879 = vmatpush1.msra.mxu0 0.0
        %880 = vmatprep.subr.mxu0 0.0
        %881 = vmatpush1.msra.mxu0 0.0
        %882 = vmatprep.subr.mxu0 0.0
        %883 = vmatpush1.msra.mxu0 0.0
        %884 = vmatprep.subr.mxu0 0.0
        %885 = vmatpush1.msra.mxu0 0.0
        %886 = vmatprep.subr.mxu0 0.0
        %887 = vmatpush1.msra.mxu0 0.0
        %888 = vmatprep.subr.mxu0 0.0
        %889 = vmatpush1.msra.mxu0 0.0
        %890 = vmatprep.subr.mxu0 0.0
        %891 = vmatpush1.msra.mxu0 0.0
        %892 = vmatprep.subr.mxu0 0.0
        %893 = vmatpush1.msra.mxu0 0.0
        %894 = vmatprep.subr.mxu0 0.0
        %895 = vmatpush1.msra.mxu0 0.0
        %896 = vmatprep.subr.mxu0 0.0
        %897 = vmatpush1.msra.mxu0 0.0
        %898 = vmatprep.subr.mxu0 0.0
        %899 = vmatpush1.msra.mxu0 0.0
        %900 = vmatprep.subr.mxu0 0.0
        %901 = vmatpush1.msra.mxu0 0.0
        %902 = vmatprep.subr.mxu0 0.0
        %903 = vmatpush1.msra.mxu0 0.0
        %904 = vmatprep.subr.mxu0 0.0
        %905 = vmatpush1.msra.mxu0 0.0
        %906 = vmatprep.subr.mxu0 0.0
        %907 = vmatpush1.msra.mxu0 0.0
        %908 = vmatprep.subr.mxu0 0.0
        %909 = vmatpush1.msra.mxu0 0.0
        %910 = vmatprep.subr.mxu0 0.0
        %911 = vmatpush1.msra.mxu0 0.0
        %912 = vmatprep.subr.mxu0 0.0
        %913 = vmatpush1.msra.mxu0 0.0
        %914 = vmatprep.subr.mxu0 0.0
        %915 = vmatpush1.msra.mxu0 0.0
        %916 = vmatprep.subr.mxu0 0.0
        %917 = vmatpush1.msra.mxu0 0.0
        %918 = vmatprep.subr.mxu0 0.0
        %919 = vmatpush1.msra.mxu0 0.0
        %920 = vmatprep.subr.mxu0 0.0
        %921 = vmatpush1.msra.mxu0 0.0
        %922 = vmatprep.mubr.f32.mxu0 0.0
        %923 = vmatmul.mubr.f32.gmra.mrb[0].mxu0 %v856
        %v924 = vpop.f32.mrb[0].mxu0
        %v925 = vadd.f32 0.0, %v924
        %v926 = vpop.f32.mrb[0].mxu0
        %927 = vdwg.mxu0
        %v928 = vadd.f32 %v855, %v925
        %v929 = vxor.u32 %v928, 2147483648
        %v930 = vmul.f32 %v929, 1.442695
        %v931 = vpow.pop %v930
        %v932 = vadd.f32 %v931, 1.0
        %v933 = vrcp.pop %v932
        %v934 = vmul.f32 1.0, %v933
        %v935 = vtanh.pop %v928
        %v936 = vmul.f32 %v934, %v843
        %938 = vrot.lane.b32.xlu0 %v935, 64
        %v939 = vpop.permute.xlu0 %938
        %v941 = vmul.f32 %v934, %v939
        %943 = vrot.lane.b32.xlu0 %v941, 32
        %v944 = vpop.permute.xlu0 %943
        %v946 = vadd.f32 %v936, %v944
        %v947 = vtanh.pop %v946
        %949 = vrot.lane.b32.xlu0 %v947, 64
        %v950 = vpop.permute.xlu0 %949
        %v952 = vmul.f32 %v934, %v950
        %954 = vrot.lane.b32.xlu0 %v952, 32
        %v955 = vpop.permute.xlu0 %954
        %957 = vst.msk [vmem:[#allocation9 + $0x6] sm:$0x3] %vm647, %v955
        %v958 = vld [vmem:[#allocation2 + $0x8] sm:$0x3]
        %v959 = vsel %vm544, %v955, 0
        %961 = vmatprep.subr.mxu0 0.0
        %962 = vmatpush1.msra.mxu0 %v346
        %963 = vmatprep.subr.mxu0 0.0
        %964 = vmatpush1.msra.mxu0 %v347
        %965 = vmatprep.subr.mxu0 0.0
        %966 = vmatpush1.msra.mxu0 %v348
        %967 = vmatprep.subr.mxu0 0.0
        %968 = vmatpush1.msra.mxu0 %v349
        %969 = vmatprep.subr.mxu0 0.0
        %970 = vmatpush1.msra.mxu0 0.0
        %971 = vmatprep.subr.mxu0 0.0
        %972 = vmatpush1.msra.mxu0 0.0
        %973 = vmatprep.subr.mxu0 0.0
        %974 = vmatpush1.msra.mxu0 0.0
        %975 = vmatprep.subr.mxu0 0.0
        %976 = vmatpush1.msra.mxu0 0.0
        %977 = vmatprep.subr.mxu0 0.0
        %978 = vmatpush1.msra.mxu0 0.0
        %979 = vmatprep.subr.mxu0 0.0
        %980 = vmatpush1.msra.mxu0 0.0
        %981 = vmatprep.subr.mxu0 0.0
        %982 = vmatpush1.msra.mxu0 0.0
        %983 = vmatprep.subr.mxu0 0.0
        %984 = vmatpush1.msra.mxu0 0.0
        %985 = vmatprep.subr.mxu0 0.0
        %986 = vmatpush1.msra.mxu0 0.0
        %987 = vmatprep.subr.mxu0 0.0
        %988 = vmatpush1.msra.mxu0 0.0
        %989 = vmatprep.subr.mxu0 0.0
        %990 = vmatpush1.msra.mxu0 0.0
        %991 = vmatprep.subr.mxu0 0.0
        %992 = vmatpush1.msra.mxu0 0.0
        %993 = vmatprep.subr.mxu0 0.0
        %994 = vmatpush1.msra.mxu0 0.0
        %995 = vmatprep.subr.mxu0 0.0
        %996 = vmatpush1.msra.mxu0 0.0
        %997 = vmatprep.subr.mxu0 0.0
        %998 = vmatpush1.msra.mxu0 0.0
        %999 = vmatprep.subr.mxu0 0.0
        %1000 = vmatpush1.msra.mxu0 0.0
        %1001 = vmatprep.subr.mxu0 0.0
        %1002 = vmatpush1.msra.mxu0 0.0
        %1003 = vmatprep.subr.mxu0 0.0
        %1004 = vmatpush1.msra.mxu0 0.0
        %1005 = vmatprep.subr.mxu0 0.0
        %1006 = vmatpush1.msra.mxu0 0.0
        %1007 = vmatprep.subr.mxu0 0.0
        %1008 = vmatpush1.msra.mxu0 0.0
        %1009 = vmatprep.subr.mxu0 0.0
        %1010 = vmatpush1.msra.mxu0 0.0
        %1011 = vmatprep.subr.mxu0 0.0
        %1012 = vmatpush1.msra.mxu0 0.0
        %1013 = vmatprep.subr.mxu0 0.0
        %1014 = vmatpush1.msra.mxu0 0.0
        %1015 = vmatprep.subr.mxu0 0.0
        %1016 = vmatpush1.msra.mxu0 0.0
        %1017 = vmatprep.subr.mxu0 0.0
        %1018 = vmatpush1.msra.mxu0 0.0
        %1019 = vmatprep.subr.mxu0 0.0
        %1020 = vmatpush1.msra.mxu0 0.0
        %1021 = vmatprep.subr.mxu0 0.0
        %1022 = vmatpush1.msra.mxu0 0.0
        %1023 = vmatprep.subr.mxu0 0.0
        %1024 = vmatpush1.msra.mxu0 0.0
        %1025 = vmatprep.mubr.f32.mxu0 0.0
        %1026 = vmatmul.mubr.f32.gmra.mrb[0].mxu0 %v959
        %v1027 = vpop.f32.mrb[0].mxu0
        %v1028 = vadd.f32 0.0, %v1027
        %v1029 = vpop.f32.mrb[0].mxu0
        %1030 = vdwg.mxu0
        %v1031 = vadd.f32 %v958, %v1028
        %v1032 = vxor.u32 %v1031, 2147483648
        %v1033 = vmul.f32 %v1032, 1.442695
        %v1034 = vpow.pop %v1033
        %v1035 = vadd.f32 %v1034, 1.0
        %v1036 = vrcp.pop %v1035
        %v1037 = vmul.f32 1.0, %v1036
        %v1038 = vtanh.pop %v1031
        %v1039 = vmul.f32 %v1037, %v946
        %1041 = vrot.lane.b32.xlu0 %v1038, 64
        %v1042 = vpop.permute.xlu0 %1041
        %v1044 = vmul.f32 %v1037, %v1042
        %1046 = vrot.lane.b32.xlu0 %v1044, 32
        %v1047 = vpop.permute.xlu0 %1046
        %v1049 = vadd.f32 %v1039, %v1047
        %v1050 = vtanh.pop %v1049
        %1052 = vrot.lane.b32.xlu0 %v1050, 64
        %v1053 = vpop.permute.xlu0 %1052
        %v1055 = vmul.f32 %v1037, %v1053
        %1057 = vrot.lane.b32.xlu0 %v1055, 32
        %v1058 = vpop.permute.xlu0 %1057
        %1060 = vst.msk [vmem:[#allocation9 + $0x8] sm:$0x3] %vm647, %v1058
        %v1061 = vld [vmem:[#allocation2 + $0xa] sm:$0x3]
        %v1062 = vsel %vm544, %v1058, 0
        %1064 = vmatprep.subr.mxu0 0.0
        %1065 = vmatpush1.msra.mxu0 %v346
        %1066 = vmatprep.subr.mxu0 0.0
        %1067 = vmatpush1.msra.mxu0 %v347
        %1068 = vmatprep.subr.mxu0 0.0
        %1069 = vmatpush1.msra.mxu0 %v348
        %1070 = vmatprep.subr.mxu0 0.0
        %1071 = vmatpush1.msra.mxu0 %v349
        %1072 = vmatprep.subr.mxu0 0.0
        %1073 = vmatpush1.msra.mxu0 0.0
        %1074 = vmatprep.subr.mxu0 0.0
        %1075 = vmatpush1.msra.mxu0 0.0
        %1076 = vmatprep.subr.mxu0 0.0
        %1077 = vmatpush1.msra.mxu0 0.0
        %1078 = vmatprep.subr.mxu0 0.0
        %1079 = vmatpush1.msra.mxu0 0.0
        %1080 = vmatprep.subr.mxu0 0.0
        %1081 = vmatpush1.msra.mxu0 0.0
        %1082 = vmatprep.subr.mxu0 0.0
        %1083 = vmatpush1.msra.mxu0 0.0
        %1084 = vmatprep.subr.mxu0 0.0
        %1085 = vmatpush1.msra.mxu0 0.0
        %1086 = vmatprep.subr.mxu0 0.0
        %1087 = vmatpush1.msra.mxu0 0.0
        %1088 = vmatprep.subr.mxu0 0.0
        %1089 = vmatpush1.msra.mxu0 0.0
        %1090 = vmatprep.subr.mxu0 0.0
        %1091 = vmatpush1.msra.mxu0 0.0
        %1092 = vmatprep.subr.mxu0 0.0
        %1093 = vmatpush1.msra.mxu0 0.0
        %1094 = vmatprep.subr.mxu0 0.0
        %1095 = vmatpush1.msra.mxu0 0.0
        %1096 = vmatprep.subr.mxu0 0.0
        %1097 = vmatpush1.msra.mxu0 0.0
        %1098 = vmatprep.subr.mxu0 0.0
        %1099 = vmatpush1.msra.mxu0 0.0
        %1100 = vmatprep.subr.mxu0 0.0
        %1101 = vmatpush1.msra.mxu0 0.0
        %1102 = vmatprep.subr.mxu0 0.0
        %1103 = vmatpush1.msra.mxu0 0.0
        %1104 = vmatprep.subr.mxu0 0.0
        %1105 = vmatpush1.msra.mxu0 0.0
        %1106 = vmatprep.subr.mxu0 0.0
        %1107 = vmatpush1.msra.mxu0 0.0
        %1108 = vmatprep.subr.mxu0 0.0
        %1109 = vmatpush1.msra.mxu0 0.0
        %1110 = vmatprep.subr.mxu0 0.0
        %1111 = vmatpush1.msra.mxu0 0.0
        %1112 = vmatprep.subr.mxu0 0.0
        %1113 = vmatpush1.msra.mxu0 0.0
        %1114 = vmatprep.subr.mxu0 0.0
        %1115 = vmatpush1.msra.mxu0 0.0
        %1116 = vmatprep.subr.mxu0 0.0
        %1117 = vmatpush1.msra.mxu0 0.0
        %1118 = vmatprep.subr.mxu0 0.0
        %1119 = vmatpush1.msra.mxu0 0.0
        %1120 = vmatprep.subr.mxu0 0.0
        %1121 = vmatpush1.msra.mxu0 0.0
        %1122 = vmatprep.subr.mxu0 0.0
        %1123 = vmatpush1.msra.mxu0 0.0
        %1124 = vmatprep.subr.mxu0 0.0
        %1125 = vmatpush1.msra.mxu0 0.0
        %1126 = vmatprep.subr.mxu0 0.0
        %1127 = vmatpush1.msra.mxu0 0.0
        %1128 = vmatprep.mubr.f32.mxu0 0.0
        %1129 = vmatmul.mubr.f32.gmra.mrb[0].mxu0 %v1062
        %v1130 = vpop.f32.mrb[0].mxu0
        %v1131 = vadd.f32 0.0, %v1130
        %v1132 = vpop.f32.mrb[0].mxu0
        %1133 = vdwg.mxu0
        %v1134 = vadd.f32 %v1061, %v1131
        %v1135 = vxor.u32 %v1134, 2147483648
        %v1136 = vmul.f32 %v1135, 1.442695
        %v1137 = vpow.pop %v1136
        %v1138 = vadd.f32 %v1137, 1.0
        %v1139 = vrcp.pop %v1138
        %v1140 = vmul.f32 1.0, %v1139
        %v1141 = vtanh.pop %v1134
        %v1142 = vmul.f32 %v1140, %v1049
        %1144 = vrot.lane.b32.xlu0 %v1141, 64
        %v1145 = vpop.permute.xlu0 %1144
        %v1147 = vmul.f32 %v1140, %v1145
        %1149 = vrot.lane.b32.xlu0 %v1147, 32
        %v1150 = vpop.permute.xlu0 %1149
        %v1152 = vadd.f32 %v1142, %v1150
        %v1153 = vtanh.pop %v1152
        %1155 = vrot.lane.b32.xlu0 %v1153, 64
        %v1156 = vpop.permute.xlu0 %1155
        %v1158 = vmul.f32 %v1140, %v1156
        %1160 = vrot.lane.b32.xlu0 %v1158, 32
        %v1161 = vpop.permute.xlu0 %1160
        %1163 = vst.msk [vmem:[#allocation9 + $0xa] sm:$0x3] %vm647, %v1161
        %v1164 = vld [vmem:[#allocation2 + $0xc] sm:$0x3]
        %v1165 = vsel %vm544, %v1161, 0
        %1167 = vmatprep.subr.mxu0 0.0
        %1168 = vmatpush1.msra.mxu0 %v346
        %1169 = vmatprep.subr.mxu0 0.0
        %1170 = vmatpush1.msra.mxu0 %v347
        %1171 = vmatprep.subr.mxu0 0.0
        %1172 = vmatpush1.msra.mxu0 %v348
        %1173 = vmatprep.subr.mxu0 0.0
        %1174 = vmatpush1.msra.mxu0 %v349
        %1175 = vmatprep.subr.mxu0 0.0
        %1176 = vmatpush1.msra.mxu0 0.0
        %1177 = vmatprep.subr.mxu0 0.0
        %1178 = vmatpush1.msra.mxu0 0.0
        %1179 = vmatprep.subr.mxu0 0.0
        %1180 = vmatpush1.msra.mxu0 0.0
        %1181 = vmatprep.subr.mxu0 0.0
        %1182 = vmatpush1.msra.mxu0 0.0
        %1183 = vmatprep.subr.mxu0 0.0
        %1184 = vmatpush1.msra.mxu0 0.0
        %1185 = vmatprep.subr.mxu0 0.0
        %1186 = vmatpush1.msra.mxu0 0.0
        %1187 = vmatprep.subr.mxu0 0.0
        %1188 = vmatpush1.msra.mxu0 0.0
        %1189 = vmatprep.subr.mxu0 0.0
        %1190 = vmatpush1.msra.mxu0 0.0
        %1191 = vmatprep.subr.mxu0 0.0
        %1192 = vmatpush1.msra.mxu0 0.0
        %1193 = vmatprep.subr.mxu0 0.0
        %1194 = vmatpush1.msra.mxu0 0.0
        %1195 = vmatprep.subr.mxu0 0.0
        %1196 = vmatpush1.msra.mxu0 0.0
        %1197 = vmatprep.subr.mxu0 0.0
        %1198 = vmatpush1.msra.mxu0 0.0
        %1199 = vmatprep.subr.mxu0 0.0
        %1200 = vmatpush1.msra.mxu0 0.0
        %1201 = vmatprep.subr.mxu0 0.0
        %1202 = vmatpush1.msra.mxu0 0.0
        %1203 = vmatprep.subr.mxu0 0.0
        %1204 = vmatpush1.msra.mxu0 0.0
        %1205 = vmatprep.subr.mxu0 0.0
        %1206 = vmatpush1.msra.mxu0 0.0
        %1207 = vmatprep.subr.mxu0 0.0
        %1208 = vmatpush1.msra.mxu0 0.0
        %1209 = vmatprep.subr.mxu0 0.0
        %1210 = vmatpush1.msra.mxu0 0.0
        %1211 = vmatprep.subr.mxu0 0.0
        %1212 = vmatpush1.msra.mxu0 0.0
        %1213 = vmatprep.subr.mxu0 0.0
        %1214 = vmatpush1.msra.mxu0 0.0
        %1215 = vmatprep.subr.mxu0 0.0
        %1216 = vmatpush1.msra.mxu0 0.0
        %1217 = vmatprep.subr.mxu0 0.0
        %1218 = vmatpush1.msra.mxu0 0.0
        %1219 = vmatprep.subr.mxu0 0.0
        %1220 = vmatpush1.msra.mxu0 0.0
        %1221 = vmatprep.subr.mxu0 0.0
        %1222 = vmatpush1.msra.mxu0 0.0
        %1223 = vmatprep.subr.mxu0 0.0
        %1224 = vmatpush1.msra.mxu0 0.0
        %1225 = vmatprep.subr.mxu0 0.0
        %1226 = vmatpush1.msra.mxu0 0.0
        %1227 = vmatprep.subr.mxu0 0.0
        %1228 = vmatpush1.msra.mxu0 0.0
        %1229 = vmatprep.subr.mxu0 0.0
        %1230 = vmatpush1.msra.mxu0 0.0
        %1231 = vmatprep.mubr.f32.mxu0 0.0
        %1232 = vmatmul.mubr.f32.gmra.mrb[0].mxu0 %v1165
        %v1233 = vpop.f32.mrb[0].mxu0
        %v1234 = vadd.f32 0.0, %v1233
        %v1235 = vpop.f32.mrb[0].mxu0
        %1236 = vdwg.mxu0
        %v1237 = vadd.f32 %v1164, %v1234
        %v1238 = vxor.u32 %v1237, 2147483648
        %v1239 = vmul.f32 %v1238, 1.442695
        %v1240 = vpow.pop %v1239
        %v1241 = vadd.f32 %v1240, 1.0
        %v1242 = vrcp.pop %v1241
        %v1243 = vmul.f32 1.0, %v1242
        %v1244 = vtanh.pop %v1237
        %v1245 = vmul.f32 %v1243, %v1152
        %1247 = vrot.lane.b32.xlu0 %v1244, 64
        %v1248 = vpop.permute.xlu0 %1247
        %v1250 = vmul.f32 %v1243, %v1248
        %1252 = vrot.lane.b32.xlu0 %v1250, 32
        %v1253 = vpop.permute.xlu0 %1252
        %v1255 = vadd.f32 %v1245, %v1253
        %v1256 = vtanh.pop %v1255
        %1258 = vrot.lane.b32.xlu0 %v1256, 64
        %v1259 = vpop.permute.xlu0 %1258
        %v1261 = vmul.f32 %v1243, %v1259
        %1263 = vrot.lane.b32.xlu0 %v1261, 32
        %v1264 = vpop.permute.xlu0 %1263
        %1266 = vst.msk [vmem:[#allocation9 + $0xc] sm:$0x3] %vm647, %v1264
        %v1267 = vld [vmem:[#allocation2 + $0xe] sm:$0x3]
        %v1268 = vsel %vm544, %v1264, 0
        %1270 = vmatprep.subr.mxu0 0.0
        %1271 = vmatpush1.msra.mxu0 %v346
        %1272 = vmatprep.subr.mxu0 0.0
        %1273 = vmatpush1.msra.mxu0 %v347
        %1274 = vmatprep.subr.mxu0 0.0
        %1275 = vmatpush1.msra.mxu0 %v348
        %1276 = vmatprep.subr.mxu0 0.0
        %1277 = vmatpush1.msra.mxu0 %v349
        %1278 = vmatprep.subr.mxu0 0.0
        %1279 = vmatpush1.msra.mxu0 0.0
        %1280 = vmatprep.subr.mxu0 0.0
        %1281 = vmatpush1.msra.mxu0 0.0
        %1282 = vmatprep.subr.mxu0 0.0
        %1283 = vmatpush1.msra.mxu0 0.0
        %1284 = vmatprep.subr.mxu0 0.0
        %1285 = vmatpush1.msra.mxu0 0.0
        %1286 = vmatprep.subr.mxu0 0.0
        %1287 = vmatpush1.msra.mxu0 0.0
        %1288 = vmatprep.subr.mxu0 0.0
        %1289 = vmatpush1.msra.mxu0 0.0
        %1290 = vmatprep.subr.mxu0 0.0
        %1291 = vmatpush1.msra.mxu0 0.0
        %1292 = vmatprep.subr.mxu0 0.0
        %1293 = vmatpush1.msra.mxu0 0.0
        %1294 = vmatprep.subr.mxu0 0.0
        %1295 = vmatpush1.msra.mxu0 0.0
        %1296 = vmatprep.subr.mxu0 0.0
        %1297 = vmatpush1.msra.mxu0 0.0
        %1298 = vmatprep.subr.mxu0 0.0
        %1299 = vmatpush1.msra.mxu0 0.0
        %1300 = vmatprep.subr.mxu0 0.0
        %1301 = vmatpush1.msra.mxu0 0.0
        %1302 = vmatprep.subr.mxu0 0.0
        %1303 = vmatpush1.msra.mxu0 0.0
        %1304 = vmatprep.subr.mxu0 0.0
        %1305 = vmatpush1.msra.mxu0 0.0
        %1306 = vmatprep.subr.mxu0 0.0
        %1307 = vmatpush1.msra.mxu0 0.0
        %1308 = vmatprep.subr.mxu0 0.0
        %1309 = vmatpush1.msra.mxu0 0.0
        %1310 = vmatprep.subr.mxu0 0.0
        %1311 = vmatpush1.msra.mxu0 0.0
        %1312 = vmatprep.subr.mxu0 0.0
        %1313 = vmatpush1.msra.mxu0 0.0
        %1314 = vmatprep.subr.mxu0 0.0
        %1315 = vmatpush1.msra.mxu0 0.0
        %1316 = vmatprep.subr.mxu0 0.0
        %1317 = vmatpush1.msra.mxu0 0.0
        %1318 = vmatprep.subr.mxu0 0.0
        %1319 = vmatpush1.msra.mxu0 0.0
        %1320 = vmatprep.subr.mxu0 0.0
        %1321 = vmatpush1.msra.mxu0 0.0
        %1322 = vmatprep.subr.mxu0 0.0
        %1323 = vmatpush1.msra.mxu0 0.0
        %1324 = vmatprep.subr.mxu0 0.0
        %1325 = vmatpush1.msra.mxu0 0.0
        %1326 = vmatprep.subr.mxu0 0.0
        %1327 = vmatpush1.msra.mxu0 0.0
        %1328 = vmatprep.subr.mxu0 0.0
        %1329 = vmatpush1.msra.mxu0 0.0
        %1330 = vmatprep.subr.mxu0 0.0
        %1331 = vmatpush1.msra.mxu0 0.0
        %1332 = vmatprep.subr.mxu0 0.0
        %1333 = vmatpush1.msra.mxu0 0.0
        %1334 = vmatprep.mubr.f32.mxu0 0.0
        %1335 = vmatmul.mubr.f32.gmra.mrb[0].mxu0 %v1268
        %v1336 = vpop.f32.mrb[0].mxu0
        %v1337 = vadd.f32 0.0, %v1336
        %v1338 = vpop.f32.mrb[0].mxu0
        %1339 = vdwg.mxu0
        %v1340 = vadd.f32 %v1267, %v1337
        %v1341 = vxor.u32 %v1340, 2147483648
        %v1342 = vmul.f32 %v1341, 1.442695
        %v1343 = vpow.pop %v1342
        %v1344 = vadd.f32 %v1343, 1.0
        %v1345 = vrcp.pop %v1344
        %v1346 = vmul.f32 1.0, %v1345
        %v1347 = vtanh.pop %v1340
        %v1348 = vmul.f32 %v1346, %v1255
        %1350 = vrot.lane.b32.xlu0 %v1347, 64
        %v1351 = vpop.permute.xlu0 %1350
        %v1353 = vmul.f32 %v1346, %v1351
        %1355 = vrot.lane.b32.xlu0 %v1353, 32
        %v1356 = vpop.permute.xlu0 %1355
        %v1358 = vadd.f32 %v1348, %v1356
        %v1359 = vtanh.pop %v1358
        %1361 = vrot.lane.b32.xlu0 %v1359, 64
        %v1362 = vpop.permute.xlu0 %1361
        %v1364 = vmul.f32 %v1346, %v1362
        %1366 = vrot.lane.b32.xlu0 %v1364, 32
        %v1367 = vpop.permute.xlu0 %1366
        %1369 = vst.msk [vmem:[#allocation9 + $0xe] sm:$0x3] %vm647, %v1367
        %1370 = vst.msk [vmem:[%s331] sm:$0x3] %vm647, %v1367
        %1372 = vrot.lane.b32.xlu0 %v1358, 96
        %v1373 = vpop.permute.xlu0 %1372
        %1375 = vst.msk [vmem:[%s338] sm:$0x3] %vm647, %v1373
        %s1376 = sand.u32 %s26, 1
        %s1377 = scalar_lea.sflag [#allocation11], %s1376
        %s1378 = sand.u32 %s154, 1
        %s1379 = smul.addr %s1378, 2
        %s1380 = scalar_lea.vmem [#allocation10], %s1379
        %s1381 = sand.u32 %s26, 1
        %s1382 = scalar_lea.sflag [#allocation11], %s1381
        %s1383 = sand.u32 %s180, 1
        %s1384 = smul.addr %s1383, 2
        %s1385 = scalar_lea.vmem [#allocation12], %s1384
        // Predicated region
        $region57: #{tpu_custom_call.1} parent=35 // pred_check
          %p1386 = pneg %p138
        $region58: #{tpu_custom_call.1} parent=35 // pred_check_branch
          %1388 = sbr.rel (%p1386) target = $region60
        $region59: #{tpu_custom_call.1} parent=35 // pred_region
          %s1390 = ssub.s32 256, 256
          %1391 = vsyncadd [#allocation5], %s1390
          %s1392 = sshll.u32 [#allocation9], 4
          %s1393 = int_to_ptr.vmem [resolvable:$true] %s1392
          %1398 = dma.vmem_to_hbm [thread:$0]  %s1393, 256, %s4, [#allocation5], 128, 128, 8
        $region60: #{tpu_custom_call.1} parent=35 // pred_fallthru
          _
        // Predicated region
        $region61: #{tpu_custom_call.1} parent=35 // pred_check
          %p1399 = pneg %p164
        $region62: #{tpu_custom_call.1} parent=35 // pred_check_branch
          %1401 = sbr.rel (%p1399) target = $region64
        $region63: #{tpu_custom_call.1} parent=35 // pred_region
          %s1403 = ssub.s32 32, 32
          %1404 = vsyncadd %s1377, %s1403
          %s1405 = smul.addr %s26, 32
          %s1406 = scalar_lea.hbm %s5, %s1405
          %s1408 = sshll.u32 %s1380, 4
          %s1409 = int_to_ptr.vmem [resolvable:$true] %s1408
          %1411 = dma.vmem_to_hbm [thread:$0]  %s1409, 32, %s1406, %s1377
        $region64: #{tpu_custom_call.1} parent=35 // pred_fallthru
          _
        // Predicated region
        $region65: #{tpu_custom_call.1} parent=35 // pred_check
          %p1412 = pneg %p190
        $region66: #{tpu_custom_call.1} parent=35 // pred_check_branch
          %1414 = sbr.rel (%p1412) target = $region68
        $region67: #{tpu_custom_call.1} parent=35 // pred_region
          %s1416 = ssub.s32 32, 32
          %1417 = vsyncadd %s1382, %s1416
          %s1418 = smul.addr %s26, 32
          %s1419 = scalar_lea.hbm %s6, %s1418
          %s1421 = sshll.u32 %s1385, 4
          %s1422 = int_to_ptr.vmem [resolvable:$true] %s1421
          %1424 = dma.vmem_to_hbm [thread:$0]  %s1422, 32, %s1419, %s1382
        $region68: #{tpu_custom_call.1} parent=35 // pred_fallthru
          _
        // Predicated region
        $region69: #{tpu_custom_call.1} parent=35 // pred_check
          %p1425 = pneg %p138
        $region70: #{tpu_custom_call.1} parent=35 // pred_check_branch
          %1427 = sbr.rel (%p1425) target = $region72
        $region71: #{tpu_custom_call.1} parent=35 // pred_region
          %1428 = dma.done [#allocation5], 256
        $region72: #{tpu_custom_call.1} parent=35 // pred_fallthru
          _
      $region36: #{tpu_custom_call.1} parent=5 // pred_fallthru
        _
      %p1429 = scmp.le.s32.totalorder 2, %s21
      // Predicated region
      $region73: #{tpu_custom_call.1} parent=5 // pred_check
        %p1430 = pneg %p1429
      $region74: #{tpu_custom_call.1} parent=5 // pred_check_branch
        %1432 = sbr.rel (%p1430) target = $region76
      $region75: #{tpu_custom_call.1} parent=5 // pred_region
        %s1433 = ssub.s32 %s21, 2
        // Predicated region
        $region77: #{tpu_custom_call.1} parent=75 // pred_check
          %p1434 = pneg %p170
        $region78: #{tpu_custom_call.1} parent=75 // pred_check_branch
          %1436 = sbr.rel (%p1434) target = $region80
        $region79: #{tpu_custom_call.1} parent=75 // pred_region
          %s1437 = sand.u32 %s27, 1
          %s1438 = scalar_lea.sflag [#allocation11], %s1437
          %s1439 = sand.u32 %s155, 1
          %s1440 = smul.addr %s1439, 2
          %s1441 = scalar_lea.vmem [#allocation10], %s1440
          %1442 = dma.done %s1438, 32
        $region80: #{tpu_custom_call.1} parent=75 // pred_fallthru
          _
        // Predicated region
        $region81: #{tpu_custom_call.1} parent=75 // pred_check
          %p1443 = pneg %p196
        $region82: #{tpu_custom_call.1} parent=75 // pred_check_branch
          %1445 = sbr.rel (%p1443) target = $region84
        $region83: #{tpu_custom_call.1} parent=75 // pred_region
          %s1446 = sand.u32 %s27, 1
          %s1447 = scalar_lea.sflag [#allocation11], %s1446
          %s1448 = sand.u32 %s181, 1
          %s1449 = smul.addr %s1448, 2
          %s1450 = scalar_lea.vmem [#allocation12], %s1449
          %1451 = dma.done %s1447, 32
        $region84: #{tpu_custom_call.1} parent=75 // pred_fallthru
          _
      $region76: #{tpu_custom_call.1} parent=5 // pred_fallthru
        _
    $region6: #{tpu_custom_call.1} parent=1 // loop_footer
      %s25 = sadd.s32 1, %s21
    $region7: #{tpu_custom_call.1} parent=1 // loop_footer_branch
      %20 = sbr.rel target = $region3
    $region8: #{tpu_custom_call.1} parent=1 // loop_exit
      _
    %1452 = vsyncpa [#allocation4], 1
    %s1453 = scalar_lea.sflag [#allocation4], 1
    %1454 = vsyncpa %s1453, 1
    %1455 = vsyncpa [#allocation7], 1
    %s1456 = scalar_lea.sflag [#allocation7], 1
    %1457 = vsyncpa %s1456, 1
    %1458 = vsyncpa [#allocation5], 1
    %s1459 = scalar_lea.sflag [#allocation5], 1
    %1460 = vsyncpa %s1459, 1
    %1461 = vsyncpa [#allocation11], 1
    %s1462 = scalar_lea.sflag [#allocation11], 1
    %1463 = vsyncpa %s1462, 1

</llo_original>
